<compile_context>
chip_gen: v6e
topology: v6e:2x2x1
jax: 0.10.0
libtpu: 0.0.40
codegen_flags: <defaults>
</compile_context>

<pallas_src>
import math
from functools import partial

import jax
import jax.numpy as jnp
from jax import lax
from jax.experimental import pallas as pl
from jax.experimental.pallas import tpu as pltpu


# ----------------------------------------------------------------------------
# small helpers
# ----------------------------------------------------------------------------
def _pick_tile(n, cap):
    """Largest tile <= cap that divides n and keeps sublane (8) alignment."""
    if n <= cap:
        return n
    for t in range(cap, 7, -1):
        if n % t == 0 and t % 8 == 0:
            return t
    return n  # fallback: one full block (still correct, just unpipelined)


def _pick_head_group(n_heads, head_dim, cap=512):
    """Smallest divisor of n_heads whose grouped width reaches >=128 lanes."""
    best = 1
    for g in range(1, n_heads + 1):
        if n_heads % g == 0 and g * head_dim <= cap:
            best = g
            if g * head_dim >= 128:
                break
    return best


def _vmem_limit_bytes():
    # ~3/4 of physical VMEM (96 MiB on v5e/v6e, 48 MiB on v7x); the default
    # scoped limit (16/32 MiB) would cap KV tiles / head groups much earlier.
    try:
        cap = int(pltpu.get_tpu_info().vmem_capacity_bytes)
    except Exception:
        cap = 64 * 1024 * 1024
    return cap * 3 // 4


# ----------------------------------------------------------------------------
# Pallas kernels
# ----------------------------------------------------------------------------
def _fused_qkv_flash_attn_kernel(xq_ref, xk_ref, xv_ref,
                                 wq_ref, bq_ref, wk_ref, bk_ref,
                                 wv_ref, bv_ref,
                                 o_ref,
                                 q_s, m_s, l_s, acc_s,
                                 *, G, E, D):
    """Grid = (B, L-tiles, head-groups, KV-tiles); one head group per step.

    xq: (tl, dm)            xk/xv: (ts, dm)
    wq/wk: (HG, dm, G*E)    wv: (HG, dm, G*D)    biases: (HG, 1, G*E|G*D), f32
    o:  (G, tl, D) slice of the head-major (B, H, L, D) output
    scratch: q_s (tl, G*E), m_s/l_s (G, tl, 1) f32, acc_s (G, tl, D) f32
    The 1/sqrt(E) scale is pre-folded into wq/bq by the wrapper.
    """
    f32 = jnp.float32
    hg = pl.program_id(2)
    s = pl.program_id(3)
    ns = pl.num_programs(3)

    # -- first KV tile of this (batch, L-tile, head-group): project Q for the
    #    whole group (lane-dense N = G*E) and reset the online-softmax state.
    @pl.when(s == 0)
    def _():
        q = jnp.dot(xq_ref[...], wq_ref[hg], preferred_element_type=f32)
        q_s[...] = (q + bq_ref[hg]).astype(q_s.dtype)
        m_s[...] = jnp.full(m_s.shape, -jnp.inf, dtype=m_s.dtype)
        l_s[...] = jnp.zeros(l_s.shape, dtype=l_s.dtype)
        acc_s[...] = jnp.zeros(acc_s.shape, dtype=acc_s.dtype)

    # -- project the current KV tile for the whole head group (lane-dense N).
    # TODO(synk): for very long sequences this K/V projection is recomputed per
    # (L-tile, head-group); a dedicated projection kernel (or per-tile scratch
    # cache) would remove that redundancy.
    k = (jnp.dot(xk_ref[...], wk_ref[hg], preferred_element_type=f32)
         + bk_ref[hg]).astype(xk_ref.dtype)
    v = (jnp.dot(xv_ref[...], wv_ref[hg], preferred_element_type=f32)
         + bv_ref[hg]).astype(xv_ref.dtype)

    # -- online softmax + attention, per head within the group (static unroll).
    for g in range(G):
        q_g = q_s[:, g * E:(g + 1) * E]
        k_g = k[:, g * E:(g + 1) * E]
        v_g = v[:, g * D:(g + 1) * D]
        # scores = q @ k^T without materializing a transpose of K.
        sc = lax.dot_general(q_g, k_g, (((1,), (1,)), ((), ())),
                             preferred_element_type=f32)        # (tl, ts)
        m_prev = m_s[g]
        m_new = jnp.maximum(m_prev, jnp.max(sc, axis=-1, keepdims=True))
        alpha = jnp.exp(m_prev - m_new)
        p = jnp.exp(sc - m_new)
        l_s[g] = alpha * l_s[g] + jnp.sum(p, axis=-1, keepdims=True)
        acc_s[g] = alpha * acc_s[g] + jnp.dot(p.astype(v_g.dtype), v_g,
                                              preferred_element_type=f32)
        m_s[g] = m_new
        # dropout(p=0.1) on the attention matrix is identity at inference time.

    # -- last KV tile: normalize (exact divide on the tiny denom) and store.
    @pl.when(s == ns - 1)
    def _():
        o_ref[...] = (acc_s[...] / l_s[...]).astype(o_ref.dtype)


def _linear_kernel(x_ref, w_ref, b_ref, o_ref):
    # x: (tm, d_in), w: (d_in, d_out) resident, b: (1, d_out) f32
    y = jnp.dot(x_ref[...], w_ref[...], preferred_element_type=jnp.float32)
    o_ref[...] = (y + b_ref[...]).astype(o_ref.dtype)


# ----------------------------------------------------------------------------
# pallas_call wrappers
# ----------------------------------------------------------------------------
def pallas_fused_qkv_attention(xq, xk, xv, wq3, bq3, wk3, bk3, wv3, bv3,
                               *, n_heads, l_tile_cap=256, kv_tile_cap=512):
    """Fused Q/K/V projection + flash attention.

    xq: (B, L, dm), xk/xv: (B, S, dm)
    wq3/wk3: (HG, dm, G*E), wv3: (HG, dm, G*D), biases: (HG, 1, G*E|G*D)
    returns head-major (B, H, L, D) (== the `mix=True` pre-view layout).
    """
    B, L, dm = xq.shape
    _, S, _ = xk.shape
    HG, _, GE = wq3.shape
    GD = wv3.shape[2]
    H = n_heads
    G = H // HG
    E = GE // G
    D = GD // G

    tl = _pick_tile(L, l_tile_cap)
    ts = _pick_tile(S, kv_tile_cap)
    nl, ns = L // tl, S // ts
    grid = (B, nl, HG, ns)
    cdtype = xq.dtype

    cost = pl.CostEstimate(
        flops=int(2 * B * (L * dm * H * E                    # Q projection
                           + nl * S * dm * H * (E + D)       # K/V projection
                           + H * L * S * (E + D))),          # QK^T and PV
        transcendentals=int(2 * B * H * L * S),
        bytes_accessed=int(cdtype.itemsize
                           * (B * L * dm + 2 * B * S * dm * nl
                              + HG * dm * (2 * GE + GD) + B * H * L * D)),
    )

    return pl.pallas_call(
        partial(_fused_qkv_flash_attn_kernel, G=G, E=E, D=D),
        out_shape=jax.ShapeDtypeStruct((B, H, L, D), cdtype),
        grid=grid,
        in_specs=[
            # Activations: block index constant across the head/KV axes, so a
            # (batch, L-tile) query block is DMA'd from HBM exactly once.
            pl.BlockSpec((None, tl, dm), lambda b, l, hg, s: (b, l, 0)),
            pl.BlockSpec((None, ts, dm), lambda b, l, hg, s: (b, s, 0)),
            pl.BlockSpec((None, ts, dm), lambda b, l, hg, s: (b, s, 0)),
            # Weights / biases: full arrays with constant index maps => VMEM
            # resident for the whole grid (weight traffic 1x, not B*HG x);
            # the head group is selected inside the kernel via program_id.
            pl.BlockSpec((HG, dm, GE), lambda b, l, hg, s: (0, 0, 0)),
            pl.BlockSpec((HG, 1, GE), lambda b, l, hg, s: (0, 0, 0)),
            pl.BlockSpec((HG, dm, GE), lambda b, l, hg, s: (0, 0, 0)),
            pl.BlockSpec((HG, 1, GE), lambda b, l, hg, s: (0, 0, 0)),
            pl.BlockSpec((HG, dm, GD), lambda b, l, hg, s: (0, 0, 0)),
            pl.BlockSpec((HG, 1, GD), lambda b, l, hg, s: (0, 0, 0)),
        ],
        # Head-major output: written only on the last KV tile of each group.
        out_specs=pl.BlockSpec((None, G, tl, D),
                               lambda b, l, hg, s: (b, hg, l, 0)),
        scratch_shapes=[
            pltpu.VMEM((tl, GE), cdtype),           # projected Q (head group)
            pltpu.VMEM((G, tl, 1), jnp.float32),    # running max
            pltpu.VMEM((G, tl, 1), jnp.float32),    # running denominator
            pltpu.VMEM((G, tl, D), jnp.float32),    # running numerator
        ],
        compiler_params=pltpu.CompilerParams(
            dimension_semantics=("parallel", "parallel",
                                 "arbitrary", "arbitrary"),
            vmem_limit_bytes=_vmem_limit_bytes()),
        cost_estimate=cost,
    )(xq, xk, xv, wq3, bq3, wk3, bk3, wv3, bv3)


def pallas_linear(x2d, w, b2, out_dtype, row_tile=512):
    """x2d: (N, d_in), w: (d_in, d_out), b2: (1, d_out) -> (N, d_out)."""
    N, d_in = x2d.shape
    d_out = w.shape[1]
    tm = N if N <= row_tile else row_tile          # row_tile % 8 == 0
    grid = (pl.cdiv(N, tm),)                       # ragged last tile is masked

    cost = pl.CostEstimate(
        flops=int(2 * N * d_in * d_out),
        transcendentals=0,
        bytes_accessed=int(x2d.dtype.itemsize * (N * d_in + d_in * d_out)
                           + 4 * (d_out + N * d_out)),
    )

    return pl.pallas_call(
        _linear_kernel,
        out_shape=jax.ShapeDtypeStruct((N, d_out), out_dtype),
        grid=grid,
        in_specs=[
            pl.BlockSpec((tm, d_in), lambda i: (i, 0)),
            pl.BlockSpec((d_in, d_out), lambda i: (0, 0)),   # resident W_o
            pl.BlockSpec((1, d_out), lambda i: (0, 0)),
        ],
        out_specs=pl.BlockSpec((tm, d_out), lambda i: (i, 0)),
        compiler_params=pltpu.CompilerParams(
            dimension_semantics=("parallel",),
            vmem_limit_bytes=_vmem_limit_bytes()),
        cost_estimate=cost,
    )(x2d, w, b2)


# ----------------------------------------------------------------------------
# one-time weight preparation (outside jit) + forward pass
# ----------------------------------------------------------------------------
def prepare_attention_params(params, n_heads, compute_dtype=jnp.float32):
    """One-time relayout of the projection weights:
       * head-group-major (HG, dm, G*E|G*D) views (head split lives in the
         kernel index, not in XLA transposes of activations),
       * 1/sqrt(E) softmax scale folded into wq / bq,
       * matmul operands cast to `compute_dtype` (bf16 feeds v6e/v7x MXUs at
         full rate); biases stay f32 and all accumulation is done in f32.
    """
    dm = params["wq"].shape[0]
    H = n_heads
    E = params["wq"].shape[1] // H
    D = params["wv"].shape[1] // H
    scale = 1.0 / math.sqrt(E)                 # module default: scale=None
    G = _pick_head_group(H, max(E, D))
    HG = H // G
    cd = compute_dtype
    f32 = jnp.float32

    def gmajor(w, width):
        return w.reshape(dm, HG, width).transpose(1, 0, 2).astype(cd)

    return dict(
        wq3=gmajor(params["wq"] * scale, G * E),
        wk3=gmajor(params["wk"], G * E),
        wv3=gmajor(params["wv"], G * D),
        bq3=(params["bq"] * scale).reshape(HG, 1, G * E).astype(f32),
        bk3=params["bk"].reshape(HG, 1, G * E).astype(f32),
        bv3=params["bv"].reshape(HG, 1, G * D).astype(f32),
        wo=params["wo"].astype(cd),
        bo2=params["bo"].reshape(1, -1).astype(f32),
    )


def attention_layer_forward(prep, queries, keys, values, n_heads):
    """AttentionLayer.forward (mix=True, returnA=False, dropout in eval mode)."""
    B, L, d_model = queries.shape
    cd = prep["wq3"].dtype
    xq = queries.astype(cd)
    xk = keys.astype(cd)
    xv = values.astype(cd)

    # Fused Q/K/V projection + flash attention, head-major (B, H, L, D).
    attn_bhld = pallas_fused_qkv_attention(
        xq, xk, xv,
        prep["wq3"], prep["bq3"], prep["wk3"], prep["bk3"],
        prep["wv3"], prep["bv3"],
        n_heads=n_heads)

    H = n_heads
    D = attn_bhld.shape[-1]

    # mix=True: out.transpose(2,1).contiguous().view(B, L, -1).  attn_bhld is
    # already in that transposed/contiguous layout, so this reshape is free.
    # (This transpose+view interleaves heads AND positions -- Informer-style
    #  quirk -- which is why W_o is NOT folded into the attention kernel: a
    #  per-head  attn_h @ Wo[h*D:(h+1)*D]  accumulation would change semantics.)
    mixed = attn_bhld.reshape(B * L, H * D)

    # Output projection (fixed row tile, resident W_o, lane-dense stores).
    out = pallas_linear(mixed, prep["wo"], prep["bo2"],
                        out_dtype=queries.dtype).reshape(B, L, d_model)
    # TODO(synk): nn.Dropout(0.1) is inference-mode identity here; a training
    # kernel would draw a mask with pltpu.prng_random_bits.
    return out, None            # returnA=False


# ----------------------------------------------------------------------------
# Pure-JAX reference (for correctness check)
# ----------------------------------------------------------------------------
def reference_forward(params, queries, keys, values, n_heads):
    B, L, d_model = queries.shape
    _, S, _ = keys.shape
    H = n_heads
    q = (queries @ params["wq"] + params["bq"]).reshape(B, L, H, -1)
    k = (keys @ params["wk"] + params["bk"]).reshape(B, S, H, -1)
    v = (values @ params["wv"] + params["bv"]).reshape(B, S, H, -1)
    E = q.shape[-1]
    scale = 1.0 / math.sqrt(E)
    scores = jnp.einsum("blhe,bshe->bhls", q, k)
    A = jax.nn.softmax(scale * scores, axis=-1)
    V = jnp.einsum("bhls,bshd->blhd", A, v)                  # (B, L, H, D)
    V = jnp.transpose(V, (0, 2, 1, 3)).reshape(B, L, -1)     # mix=True
    return V @ params["wo"] + params["bo"]


# ----------------------------------------------------------------------------
def init_params(key, d_model, n_heads):
    d_keys = d_model // n_heads
    d_values = d_model // n_heads
    ks = jax.random.split(key, 8)

    def lin(kw, kb, d_in, d_out):
        bound = 1.0 / math.sqrt(d_in)
        w = jax.random.uniform(kw, (d_in, d_out), jnp.float32, -bound, bound)
        b = jax.random.uniform(kb, (d_out,), jnp.float32, -bound, bound)
        return w, b

    wq, bq = lin(ks[0], ks[1], d_model, d_keys * n_heads)
    wk, bk = lin(ks[2], ks[3], d_model, d_keys * n_heads)
    wv, bv = lin(ks[4], ks[5], d_model, d_values * n_heads)
    wo, bo = lin(ks[6], ks[7], d_values * n_heads, d_model)
    return dict(wq=wq, bq=bq, wk=wk, bk=bk, wv=wv, bv=bv, wo=wo, bo=bo)


if __name__ == "__main__":
    B, L, S = 2, 8, 8
    d_model, n_heads = 32, 4

    key = jax.random.PRNGKey(0)
    kp, kq, kk, kv = jax.random.split(key, 4)
    params = init_params(kp, d_model, n_heads)

    queries = jax.random.normal(kq, (B, L, d_model), jnp.float32)
    keys_in = jax.random.normal(kk, (B, S, d_model), jnp.float32)
    values = jax.random.normal(kv, (B, S, d_model), jnp.float32)

    ref = reference_forward(params, queries, keys_in, values, n_heads)
    fwd = jax.jit(attention_layer_forward, static_argnums=(4,))

    # f32 compute path (tight parity with the PyTorch module).
    prep32 = prepare_attention_params(params, n_heads, jnp.float32)
    out32, A = fwd(prep32, queries, keys_in, values, n_heads)
    out32 = jax.block_until_ready(out32)
    assert out32.shape == (B, L, d_model)
    assert A is None
    assert jnp.allclose(out32, ref, atol=2e-3, rtol=2e-3), "f32 mismatch"

    # bf16 MXU path (v6e/v7x feedback): same kernels, matmuls fed bf16,
    # softmax and all accumulation still in f32.
    prep16 = prepare_attention_params(params, n_heads, jnp.bfloat16)
    out16, _ = fwd(prep16, queries, keys_in, values, n_heads)
    out16 = jax.block_until_ready(out16)
    assert out16.shape == (B, L, d_model)
    assert jnp.allclose(out16, ref, atol=5e-2, rtol=5e-2), "bf16 mismatch"

    print("KERNEL_OK")
</pallas_src>

<mosaic_0001>
module attributes {stable_mosaic.version = 11 : i64} {
  func.func @_linear_kernel(%arg0: i32, %arg1: memref<16x32xf32, #tpu.memory_space<vmem>>, %arg2: memref<32x32xf32, #tpu.memory_space<vmem>>, %arg3: memref<1x32xf32, #tpu.memory_space<vmem>>, %arg4: memref<16x32xf32, #tpu.memory_space<vmem>>) attributes {dimension_semantics = [#tpu.dimension_semantics<parallel>], iteration_bounds = array<i64: 1>, scalar_prefetch = 0 : i64, scratch_operands = 0 : i64, tpu.core_type = #tpu.core_type<tc>, window_params = [{transform_indices = @transform_0, window_bounds = array<i64: 16, 32>}, {pipeline_mode = #tpu.pipeline_mode<synchronous>, transform_indices = @transform_1, window_bounds = array<i64: 32, 32>}, {pipeline_mode = #tpu.pipeline_mode<synchronous>, transform_indices = @transform_2, window_bounds = array<i64: 1, 32>}, {transform_indices = @transform_3, window_bounds = array<i64: 16, 32>}]} {
    %c0 = arith.constant 0 : index
    %c0_0 = arith.constant 0 : index
    %0 = vector.load %arg1[%c0, %c0_0] : memref<16x32xf32, #tpu.memory_space<vmem>>, vector<16x32xf32>
    %c0_1 = arith.constant 0 : index
    %c0_2 = arith.constant 0 : index
    %1 = vector.load %arg2[%c0_1, %c0_2] : memref<32x32xf32, #tpu.memory_space<vmem>>, vector<32x32xf32>
    %cst = arith.constant dense<0.000000e+00> : vector<16x32xf32>
    %2 = tpu.matmul %0, %1, %cst {dimension_numbers = #tpu.dot_dimension_numbers<[1], [0], [0], [1], [0, 0, 1, 1], [], []>} : vector<16x32xf32>, vector<32x32xf32>, vector<16x32xf32> -> vector<16x32xf32>
    %c0_3 = arith.constant 0 : index
    %c0_4 = arith.constant 0 : index
    %3 = vector.load %arg3[%c0_3, %c0_4] : memref<1x32xf32, #tpu.memory_space<vmem>>, vector<1x32xf32>
    %4 = vector.broadcast %3 : vector<1x32xf32> to vector<16x32xf32>
    %5 = arith.addf %2, %4 : vector<16x32xf32>
    %c0_5 = arith.constant 0 : index
    %c0_6 = arith.constant 0 : index
    %6 = vector.load %arg4[%c0_5, %c0_6] : memref<16x32xf32, #tpu.memory_space<vmem>>, vector<16x32xf32>
    tpu.vector_store %arg4[%c0_5, %c0_6], %5 {strides = array<i32>} : memref<16x32xf32, #tpu.memory_space<vmem>>, vector<16x32xf32>,
    return
  }
  func.func @transform_0(%arg0: i32) -> (i32, i32) {
    %c0_i32 = arith.constant 0 : i32
    %c0_i32_0 = arith.constant 0 : i32
    return %arg0, %c0_i32 : i32, i32
  }
  func.func @transform_1(%arg0: i32) -> (i32, i32) {
    %c0_i32 = arith.constant 0 : i32
    %c0_i32_0 = arith.constant 0 : i32
    %c0_i32_1 = arith.constant 0 : i32
    return %c0_i32, %c0_i32_0 : i32, i32
  }
  func.func @transform_2(%arg0: i32) -> (i32, i32) {
    %c0_i32 = arith.constant 0 : i32
    %c0_i32_0 = arith.constant 0 : i32
    %c0_i32_1 = arith.constant 0 : i32
    return %c0_i32, %c0_i32_0 : i32, i32
  }
  func.func @transform_3(%arg0: i32) -> (i32, i32) {
    %c0_i32 = arith.constant 0 : i32
    %c0_i32_0 = arith.constant 0 : i32
    return %arg0, %c0_i32 : i32, i32
  }
}

module attributes {stable_mosaic.version = 11 : i64} {
  func.func @_fused_qkv_flash_attn_kernel(%arg0: i32, %arg1: i32, %arg2: i32, %arg3: i32, %arg4: memref<1x8x32xf32, #tpu.memory_space<vmem>>, %arg5: memref<1x8x32xf32, #tpu.memory_space<vmem>>, %arg6: memref<1x8x32xf32, #tpu.memory_space<vmem>>, %arg7: memref<1x32x32xf32, #tpu.memory_space<vmem>>, %arg8: memref<1x1x32xf32, #tpu.memory_space<vmem>>, %arg9: memref<1x32x32xf32, #tpu.memory_space<vmem>>, %arg10: memref<1x1x32xf32, #tpu.memory_space<vmem>>, %arg11: memref<1x32x32xf32, #tpu.memory_space<vmem>>, %arg12: memref<1x1x32xf32, #tpu.memory_space<vmem>>, %arg13: memref<1x4x8x8xf32, #tpu.memory_space<vmem>>, %arg14: memref<8x32xf32, #tpu.memory_space<vmem>>, %arg15: memref<4x8x1xf32, #tpu.memory_space<vmem>>, %arg16: memref<4x8x1xf32, #tpu.memory_space<vmem>>, %arg17: memref<4x8x8xf32, #tpu.memory_space<vmem>>) attributes {dimension_semantics = [#tpu.dimension_semantics<parallel>, #tpu.dimension_semantics<parallel>, #tpu.dimension_semantics<arbitrary>, #tpu.dimension_semantics<arbitrary>], iteration_bounds = array<i64: 2, 1, 1, 1>, scalar_prefetch = 0 : i64, scratch_operands = 4 : i64, tpu.core_type = #tpu.core_type<tc>, window_params = [{transform_indices = @transform_0, window_bounds = array<i64: 1, 8, 32>}, {transform_indices = @transform_1, window_bounds = array<i64: 1, 8, 32>}, {transform_indices = @transform_2, window_bounds = array<i64: 1, 8, 32>}, {pipeline_mode = #tpu.pipeline_mode<synchronous>, transform_indices = @transform_3, window_bounds = array<i64: 1, 32, 32>}, {pipeline_mode = #tpu.pipeline_mode<synchronous>, transform_indices = @transform_4, window_bounds = array<i64: 1, 1, 32>}, {pipeline_mode = #tpu.pipeline_mode<synchronous>, transform_indices = @transform_5, window_bounds = array<i64: 1, 32, 32>}, {pipeline_mode = #tpu.pipeline_mode<synchronous>, transform_indices = @transform_6, window_bounds = array<i64: 1, 1, 32>}, {pipeline_mode = #tpu.pipeline_mode<synchronous>, transform_indices = @transform_7, window_bounds = array<i64: 1, 32, 32>}, {pipeline_mode = #tpu.pipeline_mode<synchronous>, transform_indices = @transform_8, window_bounds = array<i64: 1, 1, 32>}, {transform_indices = @transform_9, window_bounds = array<i64: 1, 4, 8, 8>}]} {
    %c0_i32 = arith.constant 0 : i32
    %0 = arith.cmpi eq, %arg3, %c0_i32 : i32
    %1 = arith.extui %0 : i1 to i32
    %c0_i32_0 = arith.constant 0 : i32
    %2 = arith.cmpi ne, %1, %c0_i32_0 : i32
    scf.if %2 {
      %c0_107 = arith.constant 0 : index
      %c0_108 = arith.constant 0 : index
      %c0_109 = arith.constant 0 : index
      %168 = vector.load %arg4[%c0_107, %c0_108, %c0_109] : memref<1x8x32xf32, #tpu.memory_space<vmem>>, vector<1x8x32xf32>
      %169 = vector.shape_cast %168 : vector<1x8x32xf32> to vector<8x32xf32>
      %170 = arith.index_cast %arg2 : i32 to index
      %c0_110 = arith.constant 0 : index
      %c0_111 = arith.constant 0 : index
      %171 = vector.load %arg7[%170, %c0_110, %c0_111] : memref<1x32x32xf32, #tpu.memory_space<vmem>>, vector<1x32x32xf32>
      %172 = vector.shape_cast %171 : vector<1x32x32xf32> to vector<32x32xf32>
      %cst_112 = arith.constant dense<0.000000e+00> : vector<8x32xf32>
      %173 = tpu.matmul %169, %172, %cst_112 {dimension_numbers = #tpu.dot_dimension_numbers<[1], [0], [0], [1], [0, 0, 1, 1], [], []>} : vector<8x32xf32>, vector<32x32xf32>, vector<8x32xf32> -> vector<8x32xf32>
      %174 = arith.index_cast %arg2 : i32 to index
      %c0_113 = arith.constant 0 : index
      %c0_114 = arith.constant 0 : index
      %175 = vector.load %arg8[%174, %c0_113, %c0_114] : memref<1x1x32xf32, #tpu.memory_space<vmem>>, vector<1x1x32xf32>
      %176 = vector.shape_cast %175 : vector<1x1x32xf32> to vector<1x32xf32>
      %177 = vector.broadcast %176 : vector<1x32xf32> to vector<8x32xf32>
      %178 = arith.addf %173, %177 : vector<8x32xf32>
      %c0_115 = arith.constant 0 : index
      %c0_116 = arith.constant 0 : index
      %179 = vector.load %arg14[%c0_115, %c0_116] : memref<8x32xf32, #tpu.memory_space<vmem>>, vector<8x32xf32>
      tpu.vector_store %arg14[%c0_115, %c0_116], %178 {strides = array<i32>} : memref<8x32xf32, #tpu.memory_space<vmem>>, vector<8x32xf32>,
      %cst_117 = arith.constant 0xFF800000 : f32
      %180 = vector.broadcast %cst_117 : f32 to vector<4x8x1xf32>
      %c0_118 = arith.constant 0 : index
      %c0_119 = arith.constant 0 : index
      %c0_120 = arith.constant 0 : index
      %181 = vector.load %arg15[%c0_118, %c0_119, %c0_120] : memref<4x8x1xf32, #tpu.memory_space<vmem>>, vector<4x8x1xf32>
      tpu.vector_store %arg15[%c0_118, %c0_119, %c0_120], %180 {strides = array<i32>} : memref<4x8x1xf32, #tpu.memory_space<vmem>>, vector<4x8x1xf32>,
      %cst_121 = arith.constant 0.000000e+00 : f32
      %182 = vector.broadcast %cst_121 : f32 to vector<4x8x1xf32>
      %c0_122 = arith.constant 0 : index
      %c0_123 = arith.constant 0 : index
      %c0_124 = arith.constant 0 : index
      %183 = vector.load %arg16[%c0_122, %c0_123, %c0_124] : memref<4x8x1xf32, #tpu.memory_space<vmem>>, vector<4x8x1xf32>
      tpu.vector_store %arg16[%c0_122, %c0_123, %c0_124], %182 {strides = array<i32>} : memref<4x8x1xf32, #tpu.memory_space<vmem>>, vector<4x8x1xf32>,
      %cst_125 = arith.constant 0.000000e+00 : f32
      %184 = vector.broadcast %cst_125 : f32 to vector<4x8x8xf32>
      %c0_126 = arith.constant 0 : index
      %c0_127 = arith.constant 0 : index
      %c0_128 = arith.constant 0 : index
      %185 = vector.load %arg17[%c0_126, %c0_127, %c0_128] : memref<4x8x8xf32, #tpu.memory_space<vmem>>, vector<4x8x8xf32>
      tpu.vector_store %arg17[%c0_126, %c0_127, %c0_128], %184 {strides = array<i32>} : memref<4x8x8xf32, #tpu.memory_space<vmem>>, vector<4x8x8xf32>,
    } else {
    }
    %c0 = arith.constant 0 : index
    %c0_1 = arith.constant 0 : index
    %c0_2 = arith.constant 0 : index
    %3 = vector.load %arg5[%c0, %c0_1, %c0_2] : memref<1x8x32xf32, #tpu.memory_space<vmem>>, vector<1x8x32xf32>
    %4 = vector.shape_cast %3 : vector<1x8x32xf32> to vector<8x32xf32>
    %5 = arith.index_cast %arg2 : i32 to index
    %c0_3 = arith.constant 0 : index
    %c0_4 = arith.constant 0 : index
    %6 = vector.load %arg9[%5, %c0_3, %c0_4] : memref<1x32x32xf32, #tpu.memory_space<vmem>>, vector<1x32x32xf32>
    %7 = vector.shape_cast %6 : vector<1x32x32xf32> to vector<32x32xf32>
    %cst = arith.constant dense<0.000000e+00> : vector<8x32xf32>
    %8 = tpu.matmul %4, %7, %cst {dimension_numbers = #tpu.dot_dimension_numbers<[1], [0], [0], [1], [0, 0, 1, 1], [], []>} : vector<8x32xf32>, vector<32x32xf32>, vector<8x32xf32> -> vector<8x32xf32>
    %9 = arith.index_cast %arg2 : i32 to index
    %c0_5 = arith.constant 0 : index
    %c0_6 = arith.constant 0 : index
    %10 = vector.load %arg10[%9, %c0_5, %c0_6] : memref<1x1x32xf32, #tpu.memory_space<vmem>>, vector<1x1x32xf32>
    %11 = vector.shape_cast %10 : vector<1x1x32xf32> to vector<1x32xf32>
    %12 = vector.broadcast %11 : vector<1x32xf32> to vector<8x32xf32>
    %13 = arith.addf %8, %12 : vector<8x32xf32>
    %c0_7 = arith.constant 0 : index
    %c0_8 = arith.constant 0 : index
    %c0_9 = arith.constant 0 : index
    %14 = vector.load %arg6[%c0_7, %c0_8, %c0_9] : memref<1x8x32xf32, #tpu.memory_space<vmem>>, vector<1x8x32xf32>
    %15 = vector.shape_cast %14 : vector<1x8x32xf32> to vector<8x32xf32>
    %16 = arith.index_cast %arg2 : i32 to index
    %c0_10 = arith.constant 0 : index
    %c0_11 = arith.constant 0 : index
    %17 = vector.load %arg11[%16, %c0_10, %c0_11] : memref<1x32x32xf32, #tpu.memory_space<vmem>>, vector<1x32x32xf32>
    %18 = vector.shape_cast %17 : vector<1x32x32xf32> to vector<32x32xf32>
    %cst_12 = arith.constant dense<0.000000e+00> : vector<8x32xf32>
    %19 = tpu.matmul %15, %18, %cst_12 {dimension_numbers = #tpu.dot_dimension_numbers<[1], [0], [0], [1], [0, 0, 1, 1], [], []>} : vector<8x32xf32>, vector<32x32xf32>, vector<8x32xf32> -> vector<8x32xf32>
    %20 = arith.index_cast %arg2 : i32 to index
    %c0_13 = arith.constant 0 : index
    %c0_14 = arith.constant 0 : index
    %21 = vector.load %arg12[%20, %c0_13, %c0_14] : memref<1x1x32xf32, #tpu.memory_space<vmem>>, vector<1x1x32xf32>
    %22 = vector.shape_cast %21 : vector<1x1x32xf32> to vector<1x32xf32>
    %23 = vector.broadcast %22 : vector<1x32xf32> to vector<8x32xf32>
    %24 = arith.addf %19, %23 : vector<8x32xf32>
    %c0_15 = arith.constant 0 : index
    %c0_16 = arith.constant 0 : index
    %25 = vector.load %arg14[%c0_15, %c0_16] : memref<8x32xf32, #tpu.memory_space<vmem>>, vector<8x8xf32>
    %26 = vector.extract_strided_slice %13 {offsets = [0, 0], sizes = [8, 8], strides = [1, 1]} : vector<8x32xf32> to vector<8x8xf32>
    %27 = vector.extract_strided_slice %24 {offsets = [0, 0], sizes = [8, 8], strides = [1, 1]} : vector<8x32xf32> to vector<8x8xf32>
    %cst_17 = arith.constant dense<0.000000e+00> : vector<8x8xf32>
    %28 = tpu.matmul %25, %26, %cst_17 {dimension_numbers = #tpu.dot_dimension_numbers<[1], [1], [0], [0], [0, 0, 1, 0], [], []>} : vector<8x8xf32>, vector<8x8xf32>, vector<8x8xf32> -> vector<8x8xf32>
    %c0_18 = arith.constant 0 : index
    %c0_19 = arith.constant 0 : index
    %c0_20 = arith.constant 0 : index
    %29 = vector.load %arg15[%c0_18, %c0_19, %c0_20] : memref<4x8x1xf32, #tpu.memory_space<vmem>>, vector<1x8x1xf32>
    %30 = vector.shape_cast %29 : vector<1x8x1xf32> to vector<8x1xf32>
    %cst_21 = arith.constant dense<0xFF800000> : vector<8xf32>
    %31 = vector.multi_reduction <maximumf>, %28, %cst_21 [1] : vector<8x8xf32> to vector<8xf32>
    %32 = vector.shape_cast %31 : vector<8xf32> to vector<8x1xf32>
    %33 = arith.maximumf %30, %32 : vector<8x1xf32>
    %34 = arith.subf %30, %33 : vector<8x1xf32>
    %35 = math.exp %34 : vector<8x1xf32>
    %36 = vector.broadcast %33 : vector<8x1xf32> to vector<8x8xf32>
    %37 = arith.subf %28, %36 : vector<8x8xf32>
    %38 = math.exp %37 : vector<8x8xf32>
    %c0_22 = arith.constant 0 : index
    %c0_23 = arith.constant 0 : index
    %c0_24 = arith.constant 0 : index
    %39 = vector.load %arg16[%c0_22, %c0_23, %c0_24] : memref<4x8x1xf32, #tpu.memory_space<vmem>>, vector<1x8x1xf32>
    %40 = vector.shape_cast %39 : vector<1x8x1xf32> to vector<8x1xf32>
    %41 = arith.mulf %35, %40 : vector<8x1xf32>
    %cst_25 = arith.constant dense<0.000000e+00> : vector<8xf32>
    %42 = vector.multi_reduction <add>, %38, %cst_25 [1] : vector<8x8xf32> to vector<8xf32>
    %43 = vector.shape_cast %42 : vector<8xf32> to vector<8x1xf32>
    %44 = arith.addf %41, %43 : vector<8x1xf32>
    %c0_26 = arith.constant 0 : index
    %c0_27 = arith.constant 0 : index
    %c0_28 = arith.constant 0 : index
    %45 = vector.load %arg16[%c0_26, %c0_27, %c0_28] : memref<4x8x1xf32, #tpu.memory_space<vmem>>, vector<1x8x1xf32>
    %46 = vector.shape_cast %45 : vector<1x8x1xf32> to vector<8x1xf32>
    %47 = vector.shape_cast %44 : vector<8x1xf32> to vector<1x8x1xf32>
    tpu.vector_store %arg16[%c0_26, %c0_27, %c0_28], %47 {strides = array<i32>} : memref<4x8x1xf32, #tpu.memory_space<vmem>>, vector<1x8x1xf32>,
    %c0_29 = arith.constant 0 : index
    %c0_30 = arith.constant 0 : index
    %c0_31 = arith.constant 0 : index
    %48 = vector.load %arg17[%c0_29, %c0_30, %c0_31] : memref<4x8x8xf32, #tpu.memory_space<vmem>>, vector<1x8x8xf32>
    %49 = vector.shape_cast %48 : vector<1x8x8xf32> to vector<8x8xf32>
    %50 = vector.broadcast %35 : vector<8x1xf32> to vector<8x8xf32>
    %51 = arith.mulf %50, %49 : vector<8x8xf32>
    %cst_32 = arith.constant dense<0.000000e+00> : vector<8x8xf32>
    %52 = tpu.matmul %38, %27, %cst_32 {dimension_numbers = #tpu.dot_dimension_numbers<[1], [0], [0], [1], [0, 0, 1, 1], [], []>} : vector<8x8xf32>, vector<8x8xf32>, vector<8x8xf32> -> vector<8x8xf32>
    %53 = arith.addf %51, %52 : vector<8x8xf32>
    %c0_33 = arith.constant 0 : index
    %c0_34 = arith.constant 0 : index
    %c0_35 = arith.constant 0 : index
    %54 = vector.load %arg17[%c0_33, %c0_34, %c0_35] : memref<4x8x8xf32, #tpu.memory_space<vmem>>, vector<1x8x8xf32>
    %55 = vector.shape_cast %54 : vector<1x8x8xf32> to vector<8x8xf32>
    %56 = vector.shape_cast %53 : vector<8x8xf32> to vector<1x8x8xf32>
    tpu.vector_store %arg17[%c0_33, %c0_34, %c0_35], %56 {strides = array<i32>} : memref<4x8x8xf32, #tpu.memory_space<vmem>>, vector<1x8x8xf32>,
    %c0_36 = arith.constant 0 : index
    %c0_37 = arith.constant 0 : index
    %c0_38 = arith.constant 0 : index
    %57 = vector.load %arg15[%c0_36, %c0_37, %c0_38] : memref<4x8x1xf32, #tpu.memory_space<vmem>>, vector<1x8x1xf32>
    %58 = vector.shape_cast %57 : vector<1x8x1xf32> to vector<8x1xf32>
    %59 = vector.shape_cast %33 : vector<8x1xf32> to vector<1x8x1xf32>
    tpu.vector_store %arg15[%c0_36, %c0_37, %c0_38], %59 {strides = array<i32>} : memref<4x8x1xf32, #tpu.memory_space<vmem>>, vector<1x8x1xf32>,
    %c0_39 = arith.constant 0 : index
    %c8 = arith.constant 8 : index
    %60 = vector.load %arg14[%c0_39, %c8] : memref<8x32xf32, #tpu.memory_space<vmem>>, vector<8x8xf32>
    %61 = vector.extract_strided_slice %13 {offsets = [0, 8], sizes = [8, 8], strides = [1, 1]} : vector<8x32xf32> to vector<8x8xf32>
    %62 = vector.extract_strided_slice %24 {offsets = [0, 8], sizes = [8, 8], strides = [1, 1]} : vector<8x32xf32> to vector<8x8xf32>
    %cst_40 = arith.constant dense<0.000000e+00> : vector<8x8xf32>
    %63 = tpu.matmul %60, %61, %cst_40 {dimension_numbers = #tpu.dot_dimension_numbers<[1], [1], [0], [0], [0, 0, 1, 0], [], []>} : vector<8x8xf32>, vector<8x8xf32>, vector<8x8xf32> -> vector<8x8xf32>
    %c1 = arith.constant 1 : index
    %c0_41 = arith.constant 0 : index
    %c0_42 = arith.constant 0 : index
    %64 = vector.load %arg15[%c1, %c0_41, %c0_42] : memref<4x8x1xf32, #tpu.memory_space<vmem>>, vector<1x8x1xf32>
    %65 = vector.shape_cast %64 : vector<1x8x1xf32> to vector<8x1xf32>
    %cst_43 = arith.constant dense<0xFF800000> : vector<8xf32>
    %66 = vector.multi_reduction <maximumf>, %63, %cst_43 [1] : vector<8x8xf32> to vector<8xf32>
    %67 = vector.shape_cast %66 : vector<8xf32> to vector<8x1xf32>
    %68 = arith.maximumf %65, %67 : vector<8x1xf32>
    %69 = arith.subf %65, %68 : vector<8x1xf32>
    %70 = math.exp %69 : vector<8x1xf32>
    %71 = vector.broadcast %68 : vector<8x1xf32> to vector<8x8xf32>
    %72 = arith.subf %63, %71 : vector<8x8xf32>
    %73 = math.exp %72 : vector<8x8xf32>
    %c1_44 = arith.constant 1 : index
    %c0_45 = arith.constant 0 : index
    %c0_46 = arith.constant 0 : index
    %74 = vector.load %arg16[%c1_44, %c0_45, %c0_46] : memref<4x8x1xf32, #tpu.memory_space<vmem>>, vector<1x8x1xf32>
    %75 = vector.shape_cast %74 : vector<1x8x1xf32> to vector<8x1xf32>
    %76 = arith.mulf %70, %75 : vector<8x1xf32>
    %cst_47 = arith.constant dense<0.000000e+00> : vector<8xf32>
    %77 = vector.multi_reduction <add>, %73, %cst_47 [1] : vector<8x8xf32> to vector<8xf32>
    %78 = vector.shape_cast %77 : vector<8xf32> to vector<8x1xf32>
    %79 = arith.addf %76, %78 : vector<8x1xf32>
    %c1_48 = arith.constant 1 : index
    %c0_49 = arith.constant 0 : index
    %c0_50 = arith.constant 0 : index
    %80 = vector.load %arg16[%c1_48, %c0_49, %c0_50] : memref<4x8x1xf32, #tpu.memory_space<vmem>>, vector<1x8x1xf32>
    %81 = vector.shape_cast %80 : vector<1x8x1xf32> to vector<8x1xf32>
    %82 = vector.shape_cast %79 : vector<8x1xf32> to vector<1x8x1xf32>
    tpu.vector_store %arg16[%c1_48, %c0_49, %c0_50], %82 {strides = array<i32>} : memref<4x8x1xf32, #tpu.memory_space<vmem>>, vector<1x8x1xf32>,
    %c1_51 = arith.constant 1 : index
    %c0_52 = arith.constant 0 : index
    %c0_53 = arith.constant 0 : index
    %83 = vector.load %arg17[%c1_51, %c0_52, %c0_53] : memref<4x8x8xf32, #tpu.memory_space<vmem>>, vector<1x8x8xf32>
    %84 = vector.shape_cast %83 : vector<1x8x8xf32> to vector<8x8xf32>
    %85 = vector.broadcast %70 : vector<8x1xf32> to vector<8x8xf32>
    %86 = arith.mulf %85, %84 : vector<8x8xf32>
    %cst_54 = arith.constant dense<0.000000e+00> : vector<8x8xf32>
    %87 = tpu.matmul %73, %62, %cst_54 {dimension_numbers = #tpu.dot_dimension_numbers<[1], [0], [0], [1], [0, 0, 1, 1], [], []>} : vector<8x8xf32>, vector<8x8xf32>, vector<8x8xf32> -> vector<8x8xf32>
    %88 = arith.addf %86, %87 : vector<8x8xf32>
    %c1_55 = arith.constant 1 : index
    %c0_56 = arith.constant 0 : index
    %c0_57 = arith.constant 0 : index
    %89 = vector.load %arg17[%c1_55, %c0_56, %c0_57] : memref<4x8x8xf32, #tpu.memory_space<vmem>>, vector<1x8x8xf32>
    %90 = vector.shape_cast %89 : vector<1x8x8xf32> to vector<8x8xf32>
    %91 = vector.shape_cast %88 : vector<8x8xf32> to vector<1x8x8xf32>
    tpu.vector_store %arg17[%c1_55, %c0_56, %c0_57], %91 {strides = array<i32>} : memref<4x8x8xf32, #tpu.memory_space<vmem>>, vector<1x8x8xf32>,
    %c1_58 = arith.constant 1 : index
    %c0_59 = arith.constant 0 : index
    %c0_60 = arith.constant 0 : index
    %92 = vector.load %arg15[%c1_58, %c0_59, %c0_60] : memref<4x8x1xf32, #tpu.memory_space<vmem>>, vector<1x8x1xf32>
    %93 = vector.shape_cast %92 : vector<1x8x1xf32> to vector<8x1xf32>
    %94 = vector.shape_cast %68 : vector<8x1xf32> to vector<1x8x1xf32>
    tpu.vector_store %arg15[%c1_58, %c0_59, %c0_60], %94 {strides = array<i32>} : memref<4x8x1xf32, #tpu.memory_space<vmem>>, vector<1x8x1xf32>,
    %c0_61 = arith.constant 0 : index
    %c16 = arith.constant 16 : index
    %95 = vector.load %arg14[%c0_61, %c16] : memref<8x32xf32, #tpu.memory_space<vmem>>, vector<8x8xf32>
    %96 = vector.extract_strided_slice %13 {offsets = [0, 16], sizes = [8, 8], strides = [1, 1]} : vector<8x32xf32> to vector<8x8xf32>
    %97 = vector.extract_strided_slice %24 {offsets = [0, 16], sizes = [8, 8], strides = [1, 1]} : vector<8x32xf32> to vector<8x8xf32>
    %cst_62 = arith.constant dense<0.000000e+00> : vector<8x8xf32>
    %98 = tpu.matmul %95, %96, %cst_62 {dimension_numbers = #tpu.dot_dimension_numbers<[1], [1], [0], [0], [0, 0, 1, 0], [], []>} : vector<8x8xf32>, vector<8x8xf32>, vector<8x8xf32> -> vector<8x8xf32>
    %c2 = arith.constant 2 : index
    %c0_63 = arith.constant 0 : index
    %c0_64 = arith.constant 0 : index
    %99 = vector.load %arg15[%c2, %c0_63, %c0_64] : memref<4x8x1xf32, #tpu.memory_space<vmem>>, vector<1x8x1xf32>
    %100 = vector.shape_cast %99 : vector<1x8x1xf32> to vector<8x1xf32>
    %cst_65 = arith.constant dense<0xFF800000> : vector<8xf32>
    %101 = vector.multi_reduction <maximumf>, %98, %cst_65 [1] : vector<8x8xf32> to vector<8xf32>
    %102 = vector.shape_cast %101 : vector<8xf32> to vector<8x1xf32>
    %103 = arith.maximumf %100, %102 : vector<8x1xf32>
    %104 = arith.subf %100, %103 : vector<8x1xf32>
    %105 = math.exp %104 : vector<8x1xf32>
    %106 = vector.broadcast %103 : vector<8x1xf32> to vector<8x8xf32>
    %107 = arith.subf %98, %106 : vector<8x8xf32>
    %108 = math.exp %107 : vector<8x8xf32>
    %c2_66 = arith.constant 2 : index
    %c0_67 = arith.constant 0 : index
    %c0_68 = arith.constant 0 : index
    %109 = vector.load %arg16[%c2_66, %c0_67, %c0_68] : memref<4x8x1xf32, #tpu.memory_space<vmem>>, vector<1x8x1xf32>
    %110 = vector.shape_cast %109 : vector<1x8x1xf32> to vector<8x1xf32>
    %111 = arith.mulf %105, %110 : vector<8x1xf32>
    %cst_69 = arith.constant dense<0.000000e+00> : vector<8xf32>
    %112 = vector.multi_reduction <add>, %108, %cst_69 [1] : vector<8x8xf32> to vector<8xf32>
    %113 = vector.shape_cast %112 : vector<8xf32> to vector<8x1xf32>
    %114 = arith.addf %111, %113 : vector<8x1xf32>
    %c2_70 = arith.constant 2 : index
    %c0_71 = arith.constant 0 : index
    %c0_72 = arith.constant 0 : index
    %115 = vector.load %arg16[%c2_70, %c0_71, %c0_72] : memref<4x8x1xf32, #tpu.memory_space<vmem>>, vector<1x8x1xf32>
    %116 = vector.shape_cast %115 : vector<1x8x1xf32> to vector<8x1xf32>
    %117 = vector.shape_cast %114 : vector<8x1xf32> to vector<1x8x1xf32>
    tpu.vector_store %arg16[%c2_70, %c0_71, %c0_72], %117 {strides = array<i32>} : memref<4x8x1xf32, #tpu.memory_space<vmem>>, vector<1x8x1xf32>,
    %c2_73 = arith.constant 2 : index
    %c0_74 = arith.constant 0 : index
    %c0_75 = arith.constant 0 : index
    %118 = vector.load %arg17[%c2_73, %c0_74, %c0_75] : memref<4x8x8xf32, #tpu.memory_space<vmem>>, vector<1x8x8xf32>
    %119 = vector.shape_cast %118 : vector<1x8x8xf32> to vector<8x8xf32>
    %120 = vector.broadcast %105 : vector<8x1xf32> to vector<8x8xf32>
    %121 = arith.mulf %120, %119 : vector<8x8xf32>
    %cst_76 = arith.constant dense<0.000000e+00> : vector<8x8xf32>
    %122 = tpu.matmul %108, %97, %cst_76 {dimension_numbers = #tpu.dot_dimension_numbers<[1], [0], [0], [1], [0, 0, 1, 1], [], []>} : vector<8x8xf32>, vector<8x8xf32>, vector<8x8xf32> -> vector<8x8xf32>
    %123 = arith.addf %121, %122 : vector<8x8xf32>
    %c2_77 = arith.constant 2 : index
    %c0_78 = arith.constant 0 : index
    %c0_79 = arith.constant 0 : index
    %124 = vector.load %arg17[%c2_77, %c0_78, %c0_79] : memref<4x8x8xf32, #tpu.memory_space<vmem>>, vector<1x8x8xf32>
    %125 = vector.shape_cast %124 : vector<1x8x8xf32> to vector<8x8xf32>
    %126 = vector.shape_cast %123 : vector<8x8xf32> to vector<1x8x8xf32>
    tpu.vector_store %arg17[%c2_77, %c0_78, %c0_79], %126 {strides = array<i32>} : memref<4x8x8xf32, #tpu.memory_space<vmem>>, vector<1x8x8xf32>,
    %c2_80 = arith.constant 2 : index
    %c0_81 = arith.constant 0 : index
    %c0_82 = arith.constant 0 : index
    %127 = vector.load %arg15[%c2_80, %c0_81, %c0_82] : memref<4x8x1xf32, #tpu.memory_space<vmem>>, vector<1x8x1xf32>
    %128 = vector.shape_cast %127 : vector<1x8x1xf32> to vector<8x1xf32>
    %129 = vector.shape_cast %103 : vector<8x1xf32> to vector<1x8x1xf32>
    tpu.vector_store %arg15[%c2_80, %c0_81, %c0_82], %129 {strides = array<i32>} : memref<4x8x1xf32, #tpu.memory_space<vmem>>, vector<1x8x1xf32>,
    %c0_83 = arith.constant 0 : index
    %c24 = arith.constant 24 : index
    %130 = vector.load %arg14[%c0_83, %c24] : memref<8x32xf32, #tpu.memory_space<vmem>>, vector<8x8xf32>
    %131 = vector.extract_strided_slice %13 {offsets = [0, 24], sizes = [8, 8], strides = [1, 1]} : vector<8x32xf32> to vector<8x8xf32>
    %132 = vector.extract_strided_slice %24 {offsets = [0, 24], sizes = [8, 8], strides = [1, 1]} : vector<8x32xf32> to vector<8x8xf32>
    %cst_84 = arith.constant dense<0.000000e+00> : vector<8x8xf32>
    %133 = tpu.matmul %130, %131, %cst_84 {dimension_numbers = #tpu.dot_dimension_numbers<[1], [1], [0], [0], [0, 0, 1, 0], [], []>} : vector<8x8xf32>, vector<8x8xf32>, vector<8x8xf32> -> vector<8x8xf32>
    %c3 = arith.constant 3 : index
    %c0_85 = arith.constant 0 : index
    %c0_86 = arith.constant 0 : index
    %134 = vector.load %arg15[%c3, %c0_85, %c0_86] : memref<4x8x1xf32, #tpu.memory_space<vmem>>, vector<1x8x1xf32>
    %135 = vector.shape_cast %134 : vector<1x8x1xf32> to vector<8x1xf32>
    %cst_87 = arith.constant dense<0xFF800000> : vector<8xf32>
    %136 = vector.multi_reduction <maximumf>, %133, %cst_87 [1] : vector<8x8xf32> to vector<8xf32>
    %137 = vector.shape_cast %136 : vector<8xf32> to vector<8x1xf32>
    %138 = arith.maximumf %135, %137 : vector<8x1xf32>
    %139 = arith.subf %135, %138 : vector<8x1xf32>
    %140 = math.exp %139 : vector<8x1xf32>
    %141 = vector.broadcast %138 : vector<8x1xf32> to vector<8x8xf32>
    %142 = arith.subf %133, %141 : vector<8x8xf32>
    %143 = math.exp %142 : vector<8x8xf32>
    %c3_88 = arith.constant 3 : index
    %c0_89 = arith.constant 0 : index
    %c0_90 = arith.constant 0 : index
    %144 = vector.load %arg16[%c3_88, %c0_89, %c0_90] : memref<4x8x1xf32, #tpu.memory_space<vmem>>, vector<1x8x1xf32>
    %145 = vector.shape_cast %144 : vector<1x8x1xf32> to vector<8x1xf32>
    %146 = arith.mulf %140, %145 : vector<8x1xf32>
    %cst_91 = arith.constant dense<0.000000e+00> : vector<8xf32>
    %147 = vector.multi_reduction <add>, %143, %cst_91 [1] : vector<8x8xf32> to vector<8xf32>
    %148 = vector.shape_cast %147 : vector<8xf32> to vector<8x1xf32>
    %149 = arith.addf %146, %148 : vector<8x1xf32>
    %c3_92 = arith.constant 3 : index
    %c0_93 = arith.constant 0 : index
    %c0_94 = arith.constant 0 : index
    %150 = vector.load %arg16[%c3_92, %c0_93, %c0_94] : memref<4x8x1xf32, #tpu.memory_space<vmem>>, vector<1x8x1xf32>
    %151 = vector.shape_cast %150 : vector<1x8x1xf32> to vector<8x1xf32>
    %152 = vector.shape_cast %149 : vector<8x1xf32> to vector<1x8x1xf32>
    tpu.vector_store %arg16[%c3_92, %c0_93, %c0_94], %152 {strides = array<i32>} : memref<4x8x1xf32, #tpu.memory_space<vmem>>, vector<1x8x1xf32>,
    %c3_95 = arith.constant 3 : index
    %c0_96 = arith.constant 0 : index
    %c0_97 = arith.constant 0 : index
    %153 = vector.load %arg17[%c3_95, %c0_96, %c0_97] : memref<4x8x8xf32, #tpu.memory_space<vmem>>, vector<1x8x8xf32>
    %154 = vector.shape_cast %153 : vector<1x8x8xf32> to vector<8x8xf32>
    %155 = vector.broadcast %140 : vector<8x1xf32> to vector<8x8xf32>
    %156 = arith.mulf %155, %154 : vector<8x8xf32>
    %cst_98 = arith.constant dense<0.000000e+00> : vector<8x8xf32>
    %157 = tpu.matmul %143, %132, %cst_98 {dimension_numbers = #tpu.dot_dimension_numbers<[1], [0], [0], [1], [0, 0, 1, 1], [], []>} : vector<8x8xf32>, vector<8x8xf32>, vector<8x8xf32> -> vector<8x8xf32>
    %158 = arith.addf %156, %157 : vector<8x8xf32>
    %c3_99 = arith.constant 3 : index
    %c0_100 = arith.constant 0 : index
    %c0_101 = arith.constant 0 : index
    %159 = vector.load %arg17[%c3_99, %c0_100, %c0_101] : memref<4x8x8xf32, #tpu.memory_space<vmem>>, vector<1x8x8xf32>
    %160 = vector.shape_cast %159 : vector<1x8x8xf32> to vector<8x8xf32>
    %161 = vector.shape_cast %158 : vector<8x8xf32> to vector<1x8x8xf32>
    tpu.vector_store %arg17[%c3_99, %c0_100, %c0_101], %161 {strides = array<i32>} : memref<4x8x8xf32, #tpu.memory_space<vmem>>, vector<1x8x8xf32>,
    %c3_102 = arith.constant 3 : index
    %c0_103 = arith.constant 0 : index
    %c0_104 = arith.constant 0 : index
    %162 = vector.load %arg15[%c3_102, %c0_103, %c0_104] : memref<4x8x1xf32, #tpu.memory_space<vmem>>, vector<1x8x1xf32>
    %163 = vector.shape_cast %162 : vector<1x8x1xf32> to vector<8x1xf32>
    %164 = vector.shape_cast %138 : vector<8x1xf32> to vector<1x8x1xf32>
    tpu.vector_store %arg15[%c3_102, %c0_103, %c0_104], %164 {strides = array<i32>} : memref<4x8x1xf32, #tpu.memory_space<vmem>>, vector<1x8x1xf32>,
    %c0_i32_105 = arith.constant 0 : i32
    %165 = arith.cmpi eq, %arg3, %c0_i32_105 : i32
    %166 = arith.extui %165 : i1 to i32
    %c0_i32_106 = arith.constant 0 : i32
    %167 = arith.cmpi ne, %166, %c0_i32_106 : i32
    scf.if %167 {
      %c0_107 = arith.constant 0 : index
      %c0_108 = arith.constant 0 : index
      %c0_109 = arith.constant 0 : index
      %168 = vector.load %arg17[%c0_107, %c0_108, %c0_109] : memref<4x8x8xf32, #tpu.memory_space<vmem>>, vector<4x8x8xf32>
      %c0_110 = arith.constant 0 : index
      %c0_111 = arith.constant 0 : index
      %c0_112 = arith.constant 0 : index
      %169 = vector.load %arg16[%c0_110, %c0_111, %c0_112] : memref<4x8x1xf32, #tpu.memory_space<vmem>>, vector<4x8x1xf32>
      %170 = vector.broadcast %169 : vector<4x8x1xf32> to vector<4x8x8xf32>
      %171 = arith.divf %168, %170 : vector<4x8x8xf32>
      %c0_113 = arith.constant 0 : index
      %c0_114 = arith.constant 0 : index
      %c0_115 = arith.constant 0 : index
      %c0_116 = arith.constant 0 : index
      %172 = vector.load %arg13[%c0_113, %c0_114, %c0_115, %c0_116] : memref<1x4x8x8xf32, #tpu.memory_space<vmem>>, vector<1x4x8x8xf32>
      %173 = vector.shape_cast %172 : vector<1x4x8x8xf32> to vector<4x8x8xf32>
      %174 = vector.shape_cast %171 : vector<4x8x8xf32> to vector<1x4x8x8xf32>
      tpu.vector_store %arg13[%c0_113, %c0_114, %c0_115, %c0_116], %174 {strides = array<i32>} : memref<1x4x8x8xf32, #tpu.memory_space<vmem>>, vector<1x4x8x8xf32>,
    } else {
    }
    return
  }
  func.func @transform_0(%arg0: i32, %arg1: i32, %arg2: i32, %arg3: i32) -> (i32, i32, i32) {
    %c0_i32 = arith.constant 0 : i32
    %c0_i32_0 = arith.constant 0 : i32
    return %arg0, %arg1, %c0_i32 : i32, i32, i32
  }
  func.func @transform_1(%arg0: i32, %arg1: i32, %arg2: i32, %arg3: i32) -> (i32, i32, i32) {
    %c0_i32 = arith.constant 0 : i32
    %c0_i32_0 = arith.constant 0 : i32
    return %arg0, %arg3, %c0_i32 : i32, i32, i32
  }
  func.func @transform_2(%arg0: i32, %arg1: i32, %arg2: i32, %arg3: i32) -> (i32, i32, i32) {
    %c0_i32 = arith.constant 0 : i32
    %c0_i32_0 = arith.constant 0 : i32
    return %arg0, %arg3, %c0_i32 : i32, i32, i32
  }
  func.func @transform_3(%arg0: i32, %arg1: i32, %arg2: i32, %arg3: i32) -> (i32, i32, i32) {
    %c0_i32 = arith.constant 0 : i32
    %c0_i32_0 = arith.constant 0 : i32
    %c0_i32_1 = arith.constant 0 : i32
    %c0_i32_2 = arith.constant 0 : i32
    return %c0_i32, %c0_i32_0, %c0_i32_1 : i32, i32, i32
  }
  func.func @transform_4(%arg0: i32, %arg1: i32, %arg2: i32, %arg3: i32) -> (i32, i32, i32) {
    %c0_i32 = arith.constant 0 : i32
    %c0_i32_0 = arith.constant 0 : i32
    %c0_i32_1 = arith.constant 0 : i32
    %c0_i32_2 = arith.constant 0 : i32
    return %c0_i32, %c0_i32_0, %c0_i32_1 : i32, i32, i32
  }
  func.func @transform_5(%arg0: i32, %arg1: i32, %arg2: i32, %arg3: i32) -> (i32, i32, i32) {
    %c0_i32 = arith.constant 0 : i32
    %c0_i32_0 = arith.constant 0 : i32
    %c0_i32_1 = arith.constant 0 : i32
    %c0_i32_2 = arith.constant 0 : i32
    return %c0_i32, %c0_i32_0, %c0_i32_1 : i32, i32, i32
  }
  func.func @transform_6(%arg0: i32, %arg1: i32, %arg2: i32, %arg3: i32) -> (i32, i32, i32) {
    %c0_i32 = arith.constant 0 : i32
    %c0_i32_0 = arith.constant 0 : i32
    %c0_i32_1 = arith.constant 0 : i32
    %c0_i32_2 = arith.constant 0 : i32
    return %c0_i32, %c0_i32_0, %c0_i32_1 : i32, i32, i32
  }
  func.func @transform_7(%arg0: i32, %arg1: i32, %arg2: i32, %arg3: i32) -> (i32, i32, i32) {
    %c0_i32 = arith.constant 0 : i32
    %c0_i32_0 = arith.constant 0 : i32
    %c0_i32_1 = arith.constant 0 : i32
    %c0_i32_2 = arith.constant 0 : i32
    return %c0_i32, %c0_i32_0, %c0_i32_1 : i32, i32, i32
  }
  func.func @transform_8(%arg0: i32, %arg1: i32, %arg2: i32, %arg3: i32) -> (i32, i32, i32) {
    %c0_i32 = arith.constant 0 : i32
    %c0_i32_0 = arith.constant 0 : i32
    %c0_i32_1 = arith.constant 0 : i32
    %c0_i32_2 = arith.constant 0 : i32
    return %c0_i32, %c0_i32_0, %c0_i32_1 : i32, i32, i32
  }
  func.func @transform_9(%arg0: i32, %arg1: i32, %arg2: i32, %arg3: i32) -> (i32, i32, i32, i32) {
    %c0_i32 = arith.constant 0 : i32
    %c0_i32_0 = arith.constant 0 : i32
    return %arg0, %arg2, %arg1, %c0_i32 : i32, i32, i32, i32
  }
}

</mosaic_0001>

<llo_original>
// kernel: attention_layer_forward.3
$region0: #{attention_layer_forward.3}
  #allocation0 [shape = 'u32[]', space=smem, size = 0x4, offset = 0x4, fixed_abs, tag = 'smem constant byte address 0x4 - core index']
  #allocation1 [shape = 'u32[144,128]{1,0:T(1,128)}', space=vmem, size = 0x12000, scoped, tag = 'internal scratch']
  %s0 = inlined_call_operand.vmem [shape: f32[16,32], index: 0, kind: input, shape index: {}]
  %s1 = inlined_call_operand.vmem [shape: f32[32,32], index: 1, kind: input, shape index: {}]
  %s2 = inlined_call_operand.vmem [shape: f32[1,32], index: 2, kind: input, shape index: {}]
  %s3 = inlined_call_operand.hbm [shape: f32[16,32], index: 3, kind: output, shape index: {}]
  %s4 = sld [smem:[#allocation0]]
  $region22: #{attention_layer_forward.3} parent=0
    _
  %s6 = ssub.s32 1, %s4
  %s7 = scalar_select 0, %s6, %s4
  $region1: #{attention_layer_forward.3} parent=0
    #allocation2 [shape = 'u8[8192]{0}', space=vmem, size = 0x2000, scoped, tag = 'output window, operand 0, single buffered']
    #allocation3 [shape = 's32[1]{0}', space=sflag, size = 0x4, scoped, tag = 'scoped memory for attention_layer_forward.3']
    %8 = vsyncpa [#allocation3], 0
    // Predicated region
    $region2: #{attention_layer_forward.3} parent=1 // pred_check
      _
    $region3: #{attention_layer_forward.3} parent=1 // pred_check_branch
      %10 = sbr.rel (0) target = $region5
    $region4: #{attention_layer_forward.3} parent=1 // pred_region
      _
    $region5: #{attention_layer_forward.3} parent=1 // pred_fallthru
      _
    // Predicated region
    $region6: #{attention_layer_forward.3} parent=1 // pred_check
      _
    $region7: #{attention_layer_forward.3} parent=1 // pred_check_branch
      %12 = sbr.rel (0) target = $region9
    $region8: #{attention_layer_forward.3} parent=1 // pred_region
      _
    $region9: #{attention_layer_forward.3} parent=1 // pred_fallthru
      _
    // Predicated region
    $region10: #{attention_layer_forward.3} parent=1 // pred_check
      _
    $region11: #{attention_layer_forward.3} parent=1 // pred_check_branch
      %14 = sbr.rel (0) target = $region13
    $region12: #{attention_layer_forward.3} parent=1 // pred_region
      _
    $region13: #{attention_layer_forward.3} parent=1 // pred_fallthru
      _
    %v15 = vld [vmem:[%s0] sm:$0xff]
    %v16 = vld [vmem:[%s0 + $0x8] sm:$0xff]
    %v17 = vld [vmem:[%s1] sm:$0xff]
    %v18 = vld [vmem:[%s1 + $0x8] sm:$0xff]
    %v19 = vld [vmem:[%s1 + $0x10] sm:$0xff]
    %v20 = vld [vmem:[%s1 + $0x18] sm:$0xff]
    %v21 = vld [vmem:[%s2] sm:$0x1]
    %v23 = vlaneseq
    %v24 = vshrl.u32 %v23, 7
    %v25 = vsub.s32 0, %v24
    %v26 = vrot.slane %v21, %v25
    %vm28 = vcmask 261120
    %v30 = vsel %vm28, %v15, 0
    %v33 = vsel %vm28, %v16, 0
    %35 = vmatprep.subr.mxu0 0.0
    %36 = vmatpush1.msra.mxu0 0.0
    %37 = vmatprep.subr.mxu0 0.0
    %38 = vmatpush1.msra.mxu0 0.0
    %39 = vmatprep.subr.mxu0 0.0
    %40 = vmatpush1.msra.mxu0 0.0
    %41 = vmatprep.subr.mxu0 0.0
    %42 = vmatpush1.msra.mxu0 0.0
    %43 = vmatprep.subr.mxu0 0.0
    %44 = vmatpush1.msra.mxu0 0.0
    %45 = vmatprep.subr.mxu0 0.0
    %46 = vmatpush1.msra.mxu0 0.0
    %47 = vmatprep.subr.mxu0 0.0
    %48 = vmatpush1.msra.mxu0 0.0
    %49 = vmatprep.subr.mxu0 0.0
    %50 = vmatpush1.msra.mxu0 0.0
    %51 = vmatprep.subr.mxu0 0.0
    %52 = vmatpush1.msra.mxu0 0.0
    %53 = vmatprep.subr.mxu0 0.0
    %54 = vmatpush1.msra.mxu0 0.0
    %55 = vmatprep.subr.mxu0 0.0
    %56 = vmatpush1.msra.mxu0 0.0
    %57 = vmatprep.subr.mxu0 0.0
    %58 = vmatpush1.msra.mxu0 0.0
    %59 = vmatprep.subr.mxu0 0.0
    %60 = vmatpush1.msra.mxu0 %v20
    %61 = vmatprep.subr.mxu0 0.0
    %62 = vmatpush1.msra.mxu0 %v19
    %63 = vmatprep.subr.mxu0 0.0
    %64 = vmatpush1.msra.mxu0 %v18
    %65 = vmatprep.subr.mxu0 0.0
    %66 = vmatpush1.msra.mxu0 %v17
    %67 = vmatprep.subr.mxu0 0.0
    %68 = vmatpush2.msra.mxu0 0.0
    %69 = vmatprep.subr.mxu0 0.0
    %70 = vmatpush2.msra.mxu0 0.0
    %71 = vmatprep.subr.mxu0 0.0
    %72 = vmatpush2.msra.mxu0 0.0
    %73 = vmatprep.subr.mxu0 0.0
    %74 = vmatpush2.msra.mxu0 0.0
    %75 = vmatprep.subr.mxu0 0.0
    %76 = vmatpush2.msra.mxu0 0.0
    %77 = vmatprep.subr.mxu0 0.0
    %78 = vmatpush2.msra.mxu0 0.0
    %79 = vmatprep.subr.mxu0 0.0
    %80 = vmatpush2.msra.mxu0 0.0
    %81 = vmatprep.subr.mxu0 0.0
    %82 = vmatpush2.msra.mxu0 0.0
    %83 = vmatprep.subr.mxu0 0.0
    %84 = vmatpush2.msra.mxu0 0.0
    %85 = vmatprep.subr.mxu0 0.0
    %86 = vmatpush2.msra.mxu0 0.0
    %87 = vmatprep.subr.mxu0 0.0
    %88 = vmatpush2.msra.mxu0 0.0
    %89 = vmatprep.subr.mxu0 0.0
    %90 = vmatpush2.msra.mxu0 0.0
    %91 = vmatprep.subr.mxu0 0.0
    %92 = vmatpush2.msra.mxu0 0.0
    %93 = vmatprep.subr.mxu0 0.0
    %94 = vmatpush2.msra.mxu0 0.0
    %95 = vmatprep.subr.mxu0 0.0
    %96 = vmatpush2.msra.mxu0 0.0
    %97 = vmatprep.subr.mxu0 0.0
    %98 = vmatpush2.msra.mxu0 0.0
    %99 = vmatprep.mubr.f32.mxu0 0.0
    %100 = vmatmul.mubr.f32.gmra.mxu0 %v30
    %v101 = vpop.f32.mrf.mxu0
    %v102 = vadd.f32 %v26, %v101
    %v103 = vpop.f32.mrf.mxu0
    %104 = vmatprep.mubr.f32.mxu0 0.0
    %105 = vmatmul.mubr.f32.gmra.mxu0 %v33
    %v106 = vpop.f32.mrf.mxu0
    %v107 = vadd.f32 %v26, %v106
    %v108 = vpop.f32.mrf.mxu0
    %109 = vdwg.mxu0
    %110 = vst.msk [vmem:[#allocation2] sm:$0xff] %vm28, %v102
    %111 = vst.msk [vmem:[#allocation2 + $0x8] sm:$0xff] %vm28, %v107
    // Predicated region
    $region14: #{attention_layer_forward.3} parent=1 // pred_check
      _
    $region15: #{attention_layer_forward.3} parent=1 // pred_check_branch
      %113 = sbr.rel (0) target = $region17
    $region16: #{attention_layer_forward.3} parent=1 // pred_region
      %s115 = ssub.s32 256, 256
      %116 = vsyncadd [#allocation3], %s115
      %s117 = sshll.u32 [#allocation2], 4
      %s118 = int_to_ptr.vmem [resolvable:$true] %s117
      %123 = dma.vmem_to_hbm [thread:$0]  %s118, 256, %s3, [#allocation3], 128, 128, 8
    $region17: #{attention_layer_forward.3} parent=1 // pred_fallthru
      _
    // Predicated region
    $region18: #{attention_layer_forward.3} parent=1 // pred_check
      _
    $region19: #{attention_layer_forward.3} parent=1 // pred_check_branch
      %125 = sbr.rel (0) target = $region21
    $region20: #{attention_layer_forward.3} parent=1 // pred_region
      %126 = dma.done [#allocation3], 256
    $region21: #{attention_layer_forward.3} parent=1 // pred_fallthru
      _
    %127 = vsyncpa [#allocation3], 1

// kernel: attention_layer_forward.2
$region0: #{attention_layer_forward.2}
  #allocation0 [shape = 'u32[]', space=smem, size = 0x4, offset = 0x4, fixed_abs, tag = 'smem constant byte address 0x4 - core index']
  #allocation1 [shape = 'u32[144,128]{1,0:T(1,128)}', space=vmem, size = 0x12000, scoped, tag = 'internal scratch']
  #allocation2 [shape = 'f32[8,32]{1,0:T(8,128)}', space=vmem, size = 0x1000, scoped, tag = 'scratch operand']
  #allocation3 [shape = 'f32[4,8,1]{2,1,0:T(8,128)}', space=vmem, size = 0x4000, scoped, tag = 'scratch operand']
  #allocation4 [shape = 'f32[4,8,1]{2,1,0:T(8,128)}', space=vmem, size = 0x4000, scoped, tag = 'scratch operand']
  #allocation5 [shape = 'f32[4,8,8]{2,1,0:T(8,128)}', space=vmem, size = 0x4000, scoped, tag = 'scratch operand']
  %s0 = inlined_call_operand.hbm [shape: f32[2,8,32], index: 0, kind: input, shape index: {}]
  %s1 = inlined_call_operand.vmem [shape: f32[2,8,32], index: 1, kind: input, shape index: {}]
  %s2 = inlined_call_operand.hbm [shape: f32[2,8,32], index: 2, kind: input, shape index: {}]
  %s3 = inlined_call_operand.hbm [shape: f32[1,32,32], index: 3, kind: input, shape index: {}]
  %s4 = inlined_call_operand.hbm [shape: f32[1,1,32], index: 4, kind: input, shape index: {}]
  %s5 = inlined_call_operand.hbm [shape: f32[1,32,32], index: 5, kind: input, shape index: {}]
  %s6 = inlined_call_operand.hbm [shape: f32[1,1,32], index: 6, kind: input, shape index: {}]
  %s7 = inlined_call_operand.hbm [shape: f32[1,32,32], index: 7, kind: input, shape index: {}]
  %s8 = inlined_call_operand.hbm [shape: f32[1,1,32], index: 8, kind: input, shape index: {}]
  %s9 = inlined_call_operand.vmem [shape: f32[2,4,8,8], index: 9, kind: output, shape index: {}]
  %s10 = sld [smem:[#allocation0]]
  $region109: #{attention_layer_forward.2} parent=0
    _
  %s12 = ssub.s32 1, %s10
  %s13 = scalar_select 0, %s12, %s10
  $region1: #{attention_layer_forward.2} parent=0
    #allocation6 [shape = 'u8[8192]{0}', space=vmem, size = 0x2000, scoped, tag = 'input window, operand 0']
    #allocation7 [shape = 's32[2]{0}', space=sflag, size = 0x8, scoped, tag = 'scoped memory for attention_layer_forward.2']
    #allocation8 [shape = 'u8[8192]{0}', space=vmem, size = 0x2000, scoped, tag = 'input window, operand 2']
    #allocation9 [shape = 's32[2]{0}', space=sflag, size = 0x8, scoped, tag = 'scoped memory for attention_layer_forward.2']
    #allocation10 [shape = 'u8[16384]{0}', space=vmem, size = 0x4000, scoped, tag = 'input window, operand 3, single buffered']
    #allocation11 [shape = 'u8[512]{0}', space=vmem, size = 0x400, scoped, tag = 'input window, operand 4, single buffered']
    #allocation12 [shape = 's32[1]{0}', space=sflag, size = 0x4, scoped, tag = 'scoped memory for attention_layer_forward.2']
    #allocation13 [shape = 'u8[16384]{0}', space=vmem, size = 0x4000, scoped, tag = 'input window, operand 5, single buffered']
    #allocation14 [shape = 'u8[512]{0}', space=vmem, size = 0x400, scoped, tag = 'input window, operand 6, single buffered']
    #allocation15 [shape = 's32[1]{0}', space=sflag, size = 0x4, scoped, tag = 'scoped memory for attention_layer_forward.2']
    #allocation16 [shape = 'u8[16384]{0}', space=vmem, size = 0x4000, scoped, tag = 'input window, operand 7, single buffered']
    #allocation17 [shape = 'u8[512]{0}', space=vmem, size = 0x400, scoped, tag = 'input window, operand 8, single buffered']
    #allocation18 [shape = 's32[1]{0}', space=sflag, size = 0x4, scoped, tag = 'scoped memory for attention_layer_forward.2']
    %14 = vsyncpa [#allocation7], 0
    %s15 = scalar_lea.sflag [#allocation7], 1
    %16 = vsyncpa %s15, 0
    %17 = vsyncpa [#allocation9], 0
    %s18 = scalar_lea.sflag [#allocation9], 1
    %19 = vsyncpa %s18, 0
    %20 = vsyncpa [#allocation12], 0
    %21 = vsyncpa [#allocation15], 0
    %22 = vsyncpa [#allocation18], 0
    loop: start=0, step=1, limit=4
    $region2: #{attention_layer_forward.2} parent=1 // loop_pre_header
      _
    $region3: #{attention_layer_forward.2} parent=1 // loop_header
      %s24 = sphi 0, %s28
      %p25 = scmp.ge.s32.totalorder %s24, 4
      %s31 = sphi 0, %s57
      %s32 = sphi 0, %s53
      %s33 = sphi 0, %s49
      %s34 = sphi 0, %s45
      %s35 = sphi 0, %s31
      %s36 = sphi 0, %s32
      %s37 = sphi 0, %s33
      %s38 = sphi 0, %s34
      %s39 = sphi 0, %s35
      %s40 = sphi 0, %s36
      %s41 = sphi 0, %s37
      %s42 = sphi 0, %s38
      %s62 = sphi 0, %s64
      %s65 = sphi 0, %s62
      %s66 = sphi 0, %s65
      %s82 = sphi 0, %s66
      %s90 = sphi 0, %s92
      %s93 = sphi 0, %s90
      %s94 = sphi 0, %s93
      %s110 = sphi 0, %s94
      %s118 = sphi 0, %s120
      %s121 = sphi 0, %s118
      %s122 = sphi 0, %s121
      %s138 = sphi 0, %s122
      %s142 = sphi 0, %s142
      %s144 = sphi 0, %s142
      %s145 = sphi 0, %s144
      %s159 = sphi 0, %s145
      %s163 = sphi 0, %s163
      %s165 = sphi 0, %s163
      %s166 = sphi 0, %s165
      %s180 = sphi 0, %s166
      %s184 = sphi 0, %s184
      %s186 = sphi 0, %s184
      %s187 = sphi 0, %s186
      %s201 = sphi 0, %s187
      %s205 = sphi 0, %s205
      %s207 = sphi 0, %s205
      %s208 = sphi 0, %s207
      %s222 = sphi 0, %s208
      %s226 = sphi 0, %s226
      %s228 = sphi 0, %s226
      %s229 = sphi 0, %s228
      %s243 = sphi 0, %s229
      %s247 = sphi 0, %s247
      %s249 = sphi 0, %s247
      %s250 = sphi 0, %s249
      %s264 = sphi 0, %s250
      %s274 = sphi 0, %s276
      %s277 = sphi 0, %s274
      %s278 = sphi 0, %s277
      %s294 = sphi 0, %s278
    $region4: #{attention_layer_forward.2} parent=1 // loop_header_branch
      %27 = sbr.rel (%p25) target = $region8
    $region5: #{attention_layer_forward.2} parent=1 // loop_body
      %s29 = ssub.s32 %s24, 1
      %s30 = ssub.s32 %s24, 2
      %s43 = sadd.s32 1, %s34
      %p44 = scmp.ge.s32.totalorder %s43, 1
      %s45 = scalar_select %p44, 0, %s43
      %s46 = sadd.s32 1, %s33
      %s47 = scalar_select %p44, %s46, %s33
      %p48 = scmp.ge.s32.totalorder %s47, 1
      %s49 = scalar_select %p48, 0, %s47
      %s50 = sadd.s32 1, %s32
      %s51 = scalar_select %p48, %s50, %s32
      %p52 = scmp.ge.s32.totalorder %s51, 1
      %s53 = scalar_select %p52, 0, %s51
      %s54 = sadd.s32 1, %s31
      %s55 = scalar_select %p52, %s54, %s31
      %p56 = scmp.ge.s32.totalorder %s55, 2
      %s57 = scalar_select %p56, 0, %s55
      %s58 = ssub.s32 %s31, %s57
      %s59 = ssub.s32 %s32, %s53
      %s60 = sor.u32 %s58, %s59
      %p61 = scmp.eq.s32.totalorder %s60, 0
      %s63 = sadd.s32 %s62, 1
      %s64 = scalar_select %p61, %s62, %s63
      %p67 = pneg %p61
      %p68 = scmp.eq.s32.totalorder %s24, 1
      %p69 = por %p67, %p68
      %p70 = scmp.ne.s32.totalorder %s62, %s65
      %p71 = scmp.eq.s32.totalorder %s24, 0
      %p72 = por %p70, %p71
      %p73 = scmp.ne.s32.totalorder %s62, %s65
      %p74 = scmp.eq.s32.totalorder %s29, 1
      %p75 = por %p73, %p74
      %p76 = scmp.ne.s32.totalorder %s65, %s66
      %p77 = scmp.eq.s32.totalorder %s29, 0
      %p78 = por %p76, %p77
      %p79 = scmp.ne.s32.totalorder %s65, %s66
      %p80 = scmp.eq.s32.totalorder %s30, 1
      %p81 = por %p79, %p80
      %p83 = scmp.ne.s32.totalorder %s66, %s82
      %p84 = scmp.eq.s32.totalorder %s30, 0
      %p85 = por %p83, %p84
      %s86 = ssub.s32 %s31, %s57
      %s87 = ssub.s32 %s34, %s45
      %s88 = sor.u32 %s86, %s87
      %p89 = scmp.eq.s32.totalorder %s88, 0
      %s91 = sadd.s32 %s90, 1
      %s92 = scalar_select %p89, %s90, %s91
      %p95 = pneg %p89
      %p96 = scmp.eq.s32.totalorder %s24, 1
      %p97 = por %p95, %p96
      %p98 = scmp.ne.s32.totalorder %s90, %s93
      %p99 = scmp.eq.s32.totalorder %s24, 0
      %p100 = por %p98, %p99
      %p101 = scmp.ne.s32.totalorder %s90, %s93
      %p102 = scmp.eq.s32.totalorder %s29, 1
      %p103 = por %p101, %p102
      %p104 = scmp.ne.s32.totalorder %s93, %s94
      %p105 = scmp.eq.s32.totalorder %s29, 0
      %p106 = por %p104, %p105
      %p107 = scmp.ne.s32.totalorder %s93, %s94
      %p108 = scmp.eq.s32.totalorder %s30, 1
      %p109 = por %p107, %p108
      %p111 = scmp.ne.s32.totalorder %s94, %s110
      %p112 = scmp.eq.s32.totalorder %s30, 0
      %p113 = por %p111, %p112
      %s114 = ssub.s32 %s31, %s57
      %s115 = ssub.s32 %s34, %s45
      %s116 = sor.u32 %s114, %s115
      %p117 = scmp.eq.s32.totalorder %s116, 0
      %s119 = sadd.s32 %s118, 1
      %s120 = scalar_select %p117, %s118, %s119
      %p123 = pneg %p117
      %p124 = scmp.eq.s32.totalorder %s24, 1
      %p125 = por %p123, %p124
      %p126 = scmp.ne.s32.totalorder %s118, %s121
      %p127 = scmp.eq.s32.totalorder %s24, 0
      %p128 = por %p126, %p127
      %p129 = scmp.ne.s32.totalorder %s118, %s121
      %p130 = scmp.eq.s32.totalorder %s29, 1
      %p131 = por %p129, %p130
      %p132 = scmp.ne.s32.totalorder %s121, %s122
      %p133 = scmp.eq.s32.totalorder %s29, 0
      %p134 = por %p132, %p133
      %p135 = scmp.ne.s32.totalorder %s121, %s122
      %p136 = scmp.eq.s32.totalorder %s30, 1
      %p137 = por %p135, %p136
      %p139 = scmp.ne.s32.totalorder %s122, %s138
      %p140 = scmp.eq.s32.totalorder %s30, 0
      %p141 = por %p139, %p140
      %s143 = sadd.s32 %s142, 1
      %p146 = scmp.eq.s32.totalorder %s24, 1
      %p147 = scmp.ne.s32.totalorder %s142, %s144
      %p148 = scmp.eq.s32.totalorder %s24, 0
      %p149 = por %p147, %p148
      %p150 = scmp.ne.s32.totalorder %s142, %s144
      %p151 = scmp.eq.s32.totalorder %s29, 1
      %p152 = por %p150, %p151
      %p153 = scmp.ne.s32.totalorder %s144, %s145
      %p154 = scmp.eq.s32.totalorder %s29, 0
      %p155 = por %p153, %p154
      %p156 = scmp.ne.s32.totalorder %s144, %s145
      %p157 = scmp.eq.s32.totalorder %s30, 1
      %p158 = por %p156, %p157
      %p160 = scmp.ne.s32.totalorder %s145, %s159
      %p161 = scmp.eq.s32.totalorder %s30, 0
      %p162 = por %p160, %p161
      %s164 = sadd.s32 %s163, 1
      %p167 = scmp.eq.s32.totalorder %s24, 1
      %p168 = scmp.ne.s32.totalorder %s163, %s165
      %p169 = scmp.eq.s32.totalorder %s24, 0
      %p170 = por %p168, %p169
      %p171 = scmp.ne.s32.totalorder %s163, %s165
      %p172 = scmp.eq.s32.totalorder %s29, 1
      %p173 = por %p171, %p172
      %p174 = scmp.ne.s32.totalorder %s165, %s166
      %p175 = scmp.eq.s32.totalorder %s29, 0
      %p176 = por %p174, %p175
      %p177 = scmp.ne.s32.totalorder %s165, %s166
      %p178 = scmp.eq.s32.totalorder %s30, 1
      %p179 = por %p177, %p178
      %p181 = scmp.ne.s32.totalorder %s166, %s180
      %p182 = scmp.eq.s32.totalorder %s30, 0
      %p183 = por %p181, %p182
      %s185 = sadd.s32 %s184, 1
      %p188 = scmp.eq.s32.totalorder %s24, 1
      %p189 = scmp.ne.s32.totalorder %s184, %s186
      %p190 = scmp.eq.s32.totalorder %s24, 0
      %p191 = por %p189, %p190
      %p192 = scmp.ne.s32.totalorder %s184, %s186
      %p193 = scmp.eq.s32.totalorder %s29, 1
      %p194 = por %p192, %p193
      %p195 = scmp.ne.s32.totalorder %s186, %s187
      %p196 = scmp.eq.s32.totalorder %s29, 0
      %p197 = por %p195, %p196
      %p198 = scmp.ne.s32.totalorder %s186, %s187
      %p199 = scmp.eq.s32.totalorder %s30, 1
      %p200 = por %p198, %p199
      %p202 = scmp.ne.s32.totalorder %s187, %s201
      %p203 = scmp.eq.s32.totalorder %s30, 0
      %p204 = por %p202, %p203
      %s206 = sadd.s32 %s205, 1
      %p209 = scmp.eq.s32.totalorder %s24, 1
      %p210 = scmp.ne.s32.totalorder %s205, %s207
      %p211 = scmp.eq.s32.totalorder %s24, 0
      %p212 = por %p210, %p211
      %p213 = scmp.ne.s32.totalorder %s205, %s207
      %p214 = scmp.eq.s32.totalorder %s29, 1
      %p215 = por %p213, %p214
      %p216 = scmp.ne.s32.totalorder %s207, %s208
      %p217 = scmp.eq.s32.totalorder %s29, 0
      %p218 = por %p216, %p217
      %p219 = scmp.ne.s32.totalorder %s207, %s208
      %p220 = scmp.eq.s32.totalorder %s30, 1
      %p221 = por %p219, %p220
      %p223 = scmp.ne.s32.totalorder %s208, %s222
      %p224 = scmp.eq.s32.totalorder %s30, 0
      %p225 = por %p223, %p224
      %s227 = sadd.s32 %s226, 1
      %p230 = scmp.eq.s32.totalorder %s24, 1
      %p231 = scmp.ne.s32.totalorder %s226, %s228
      %p232 = scmp.eq.s32.totalorder %s24, 0
      %p233 = por %p231, %p232
      %p234 = scmp.ne.s32.totalorder %s226, %s228
      %p235 = scmp.eq.s32.totalorder %s29, 1
      %p236 = por %p234, %p235
      %p237 = scmp.ne.s32.totalorder %s228, %s229
      %p238 = scmp.eq.s32.totalorder %s29, 0
      %p239 = por %p237, %p238
      %p240 = scmp.ne.s32.totalorder %s228, %s229
      %p241 = scmp.eq.s32.totalorder %s30, 1
      %p242 = por %p240, %p241
      %p244 = scmp.ne.s32.totalorder %s229, %s243
      %p245 = scmp.eq.s32.totalorder %s30, 0
      %p246 = por %p244, %p245
      %s248 = sadd.s32 %s247, 1
      %p251 = scmp.eq.s32.totalorder %s24, 1
      %p252 = scmp.ne.s32.totalorder %s247, %s249
      %p253 = scmp.eq.s32.totalorder %s24, 0
      %p254 = por %p252, %p253
      %p255 = scmp.ne.s32.totalorder %s247, %s249
      %p256 = scmp.eq.s32.totalorder %s29, 1
      %p257 = por %p255, %p256
      %p258 = scmp.ne.s32.totalorder %s249, %s250
      %p259 = scmp.eq.s32.totalorder %s29, 0
      %p260 = por %p258, %p259
      %p261 = scmp.ne.s32.totalorder %s249, %s250
      %p262 = scmp.eq.s32.totalorder %s30, 1
      %p263 = por %p261, %p262
      %p265 = scmp.ne.s32.totalorder %s250, %s264
      %p266 = scmp.eq.s32.totalorder %s30, 0
      %p267 = por %p265, %p266
      %s268 = ssub.s32 %s31, %s57
      %s269 = ssub.s32 %s33, %s49
      %s270 = sor.u32 %s268, %s269
      %s271 = ssub.s32 %s32, %s53
      %s272 = sor.u32 %s270, %s271
      %p273 = scmp.eq.s32.totalorder %s272, 0
      %s275 = sadd.s32 %s274, 1
      %s276 = scalar_select %p273, %s274, %s275
      %p279 = pneg %p273
      %p280 = scmp.eq.s32.totalorder %s24, 1
      %p281 = por %p279, %p280
      %p282 = scmp.ne.s32.totalorder %s274, %s277
      %p283 = scmp.eq.s32.totalorder %s24, 0
      %p284 = por %p282, %p283
      %p285 = scmp.ne.s32.totalorder %s274, %s277
      %p286 = scmp.eq.s32.totalorder %s29, 1
      %p287 = por %p285, %p286
      %p288 = scmp.ne.s32.totalorder %s277, %s278
      %p289 = scmp.eq.s32.totalorder %s29, 0
      %p290 = por %p288, %p289
      %p291 = scmp.ne.s32.totalorder %s277, %s278
      %p292 = scmp.eq.s32.totalorder %s30, 1
      %p293 = por %p291, %p292
      %p295 = scmp.ne.s32.totalorder %s278, %s294
      %p296 = scmp.eq.s32.totalorder %s30, 0
      %p297 = por %p295, %p296
      %p298 = scmp.le.s32.totalorder 1, %s24
      %p299 = scmp.lt.s32.totalorder %s24, 3
      %p300 = pnand %p298, %p299
      %p301 = pneg %p300
      // Predicated region
      $region9: #{attention_layer_forward.2} parent=5 // pred_check
        _
      $region10: #{attention_layer_forward.2} parent=5 // pred_check_branch
        %303 = sbr.rel (%p300) target = $region12
      $region11: #{attention_layer_forward.2} parent=5 // pred_region
        %s304 = ssub.s32 %s24, 1
        // Predicated region
        $region13: #{attention_layer_forward.2} parent=11 // pred_check
          %p305 = pneg %p155
        $region14: #{attention_layer_forward.2} parent=11 // pred_check_branch
          %307 = sbr.rel (%p305) target = $region16
        $region15: #{attention_layer_forward.2} parent=11 // pred_region
          %s309 = ssub.s32 512, 512
          %310 = vsyncadd [#allocation9], %s309
          %s311 = sshll.u32 [#allocation10], 4
          %s312 = int_to_ptr.vmem [resolvable:$true] %s311
          %317 = dma.hbm_to_vmem [thread:$0]  %s3, 512, %s312, [#allocation9], 128, 128, 8
        $region16: #{attention_layer_forward.2} parent=11 // pred_fallthru
          _
        // Predicated region
        $region17: #{attention_layer_forward.2} parent=11 // pred_check
          %p318 = pneg %p176
        $region18: #{attention_layer_forward.2} parent=11 // pred_check_branch
          %320 = sbr.rel (%p318) target = $region20
        $region19: #{attention_layer_forward.2} parent=11 // pred_region
          %s322 = ssub.s32 16, 16
          %323 = vsyncadd [#allocation12], %s322
          %s325 = sshll.u32 [#allocation11], 4
          %s326 = int_to_ptr.vmem [resolvable:$true] %s325
          %328 = dma.hbm_to_vmem [thread:$0]  %s4, 16, %s326, [#allocation12]
        $region20: #{attention_layer_forward.2} parent=11 // pred_fallthru
          _
        // Predicated region
        $region21: #{attention_layer_forward.2} parent=11 // pred_check
          %p329 = pneg %p197
        $region22: #{attention_layer_forward.2} parent=11 // pred_check_branch
          %331 = sbr.rel (%p329) target = $region24
        $region23: #{attention_layer_forward.2} parent=11 // pred_region
          %s333 = ssub.s32 512, 512
          %334 = vsyncadd [#allocation12], %s333
          %s335 = sshll.u32 [#allocation13], 4
          %s336 = int_to_ptr.vmem [resolvable:$true] %s335
          %341 = dma.hbm_to_vmem [thread:$0]  %s5, 512, %s336, [#allocation12], 128, 128, 8
        $region24: #{attention_layer_forward.2} parent=11 // pred_fallthru
          _
        // Predicated region
        $region25: #{attention_layer_forward.2} parent=11 // pred_check
          %p342 = pneg %p218
        $region26: #{attention_layer_forward.2} parent=11 // pred_check_branch
          %344 = sbr.rel (%p342) target = $region28
        $region27: #{attention_layer_forward.2} parent=11 // pred_region
          %s346 = ssub.s32 16, 16
          %347 = vsyncadd [#allocation15], %s346
          %s349 = sshll.u32 [#allocation14], 4
          %s350 = int_to_ptr.vmem [resolvable:$true] %s349
          %352 = dma.hbm_to_vmem [thread:$0]  %s6, 16, %s350, [#allocation15]
        $region28: #{attention_layer_forward.2} parent=11 // pred_fallthru
          _
        // Predicated region
        $region29: #{attention_layer_forward.2} parent=11 // pred_check
          %p353 = pneg %p239
        $region30: #{attention_layer_forward.2} parent=11 // pred_check_branch
          %355 = sbr.rel (%p353) target = $region32
        $region31: #{attention_layer_forward.2} parent=11 // pred_region
          %s357 = ssub.s32 512, 512
          %358 = vsyncadd [#allocation15], %s357
          %s359 = sshll.u32 [#allocation16], 4
          %s360 = int_to_ptr.vmem [resolvable:$true] %s359
          %365 = dma.hbm_to_vmem [thread:$0]  %s7, 512, %s360, [#allocation15], 128, 128, 8
        $region32: #{attention_layer_forward.2} parent=11 // pred_fallthru
          _
        // Predicated region
        $region33: #{attention_layer_forward.2} parent=11 // pred_check
          %p366 = pneg %p260
        $region34: #{attention_layer_forward.2} parent=11 // pred_check_branch
          %368 = sbr.rel (%p366) target = $region36
        $region35: #{attention_layer_forward.2} parent=11 // pred_region
          %s370 = ssub.s32 16, 16
          %371 = vsyncadd [#allocation18], %s370
          %s373 = sshll.u32 [#allocation17], 4
          %s374 = int_to_ptr.vmem [resolvable:$true] %s373
          %376 = dma.hbm_to_vmem [thread:$0]  %s8, 16, %s374, [#allocation18]
        $region36: #{attention_layer_forward.2} parent=11 // pred_fallthru
          _
      $region12: #{attention_layer_forward.2} parent=5 // pred_fallthru
        _
      %p377 = scmp.lt.s32.totalorder %s24, 2
      // Predicated region
      $region37: #{attention_layer_forward.2} parent=5 // pred_check
        %p378 = pneg %p377
      $region38: #{attention_layer_forward.2} parent=5 // pred_check_branch
        %380 = sbr.rel (%p378) target = $region40
      $region39: #{attention_layer_forward.2} parent=5 // pred_region
        // Predicated region
        $region41: #{attention_layer_forward.2} parent=39 // pred_check
          %p381 = pneg %p72
        $region42: #{attention_layer_forward.2} parent=39 // pred_check_branch
          %383 = sbr.rel (%p381) target = $region44
        $region43: #{attention_layer_forward.2} parent=39 // pred_region
          %s384 = sand.u32 %s62, 1
          %s385 = scalar_lea.sflag [#allocation7], %s384
          %s386 = sand.u32 %s62, 1
          %s387 = smul.addr %s386, 8
          %s388 = scalar_lea.vmem [#allocation6], %s387
          %s390 = ssub.s32 128, 128
          %391 = vsyncadd %s385, %s390
          %s392 = sadd.s32 %s32, %s31
          %s393 = smul.addr %s392, 128
          %s394 = scalar_lea.hbm %s0, %s393
          %s396 = sshll.u32 %s388, 4
          %s397 = int_to_ptr.vmem [resolvable:$true] %s396
          %399 = dma.hbm_to_vmem [thread:$0]  %s394, 128, %s397, %s385
        $region44: #{attention_layer_forward.2} parent=39 // pred_fallthru
          _
        // Predicated region
        $region45: #{attention_layer_forward.2} parent=39 // pred_check
          %p400 = pneg %p100
        $region46: #{attention_layer_forward.2} parent=39 // pred_check_branch
          %402 = sbr.rel (%p400) target = $region48
        $region47: #{attention_layer_forward.2} parent=39 // pred_region
          %p403 = scmp.lt.s32.totalorder %s31, 1
          %s404 = scalar_select %p403, %s31, 1
          %p405 = scmp.lt.s32.totalorder %s34, 0
          %s406 = scalar_select %p405, %s34, 0
          %s407 = sadd.s32 %s406, %s404
          %s408 = smul.addr %s407, 8
          %s409 = scalar_lea.vmem %s1, %s408
        $region48: #{attention_layer_forward.2} parent=39 // pred_fallthru
          _
        // Predicated region
        $region49: #{attention_layer_forward.2} parent=39 // pred_check
          %p410 = pneg %p128
        $region50: #{attention_layer_forward.2} parent=39 // pred_check_branch
          %412 = sbr.rel (%p410) target = $region52
        $region51: #{attention_layer_forward.2} parent=39 // pred_region
          %s413 = sand.u32 %s24, 1
          %s414 = scalar_lea.sflag [#allocation9], %s413
          %s415 = sand.u32 %s118, 1
          %s416 = smul.addr %s415, 8
          %s417 = scalar_lea.vmem [#allocation8], %s416
          %s419 = ssub.s32 128, 128
          %420 = vsyncadd %s414, %s419
          %s421 = sadd.s32 %s34, %s31
          %s422 = smul.addr %s421, 128
          %s423 = scalar_lea.hbm %s2, %s422
          %s425 = sshll.u32 %s417, 4
          %s426 = int_to_ptr.vmem [resolvable:$true] %s425
          %428 = dma.hbm_to_vmem [thread:$0]  %s423, 128, %s426, %s414
        $region52: #{attention_layer_forward.2} parent=39 // pred_fallthru
          _
      $region40: #{attention_layer_forward.2} parent=5 // pred_fallthru
        _
      %p429 = scmp.le.s32.totalorder 1, %s24
      %p430 = scmp.lt.s32.totalorder %s24, 3
      %p431 = pnand %p429, %p430
      %p432 = pneg %p431
      // Predicated region
      $region53: #{attention_layer_forward.2} parent=5 // pred_check
        _
      $region54: #{attention_layer_forward.2} parent=5 // pred_check_branch
        %434 = sbr.rel (%p431) target = $region56
      $region55: #{attention_layer_forward.2} parent=5 // pred_region
        %s435 = ssub.s32 %s24, 1
        %s436 = sand.u32 %s65, 1
        %s437 = scalar_lea.sflag [#allocation7], %s436
        %s438 = sand.u32 %s65, 1
        %s439 = smul.addr %s438, 8
        %s440 = scalar_lea.vmem [#allocation6], %s439
        // Predicated region
        $region57: #{attention_layer_forward.2} parent=55 // pred_check
          %p441 = pneg %p78
        $region58: #{attention_layer_forward.2} parent=55 // pred_check_branch
          %443 = sbr.rel (%p441) target = $region60
        $region59: #{attention_layer_forward.2} parent=55 // pred_region
          %444 = dma.done %s437, 128
        $region60: #{attention_layer_forward.2} parent=55 // pred_fallthru
          _
        %s445 = sand.u32 %s29, 1
        %s446 = scalar_lea.sflag [#allocation9], %s445
        %s447 = sand.u32 %s121, 1
        %s448 = smul.addr %s447, 8
        %s449 = scalar_lea.vmem [#allocation8], %s448
        // Predicated region
        $region61: #{attention_layer_forward.2} parent=55 // pred_check
          %p450 = pneg %p134
        $region62: #{attention_layer_forward.2} parent=55 // pred_check_branch
          %452 = sbr.rel (%p450) target = $region64
        $region63: #{attention_layer_forward.2} parent=55 // pred_region
          %453 = dma.done %s446, 128
        $region64: #{attention_layer_forward.2} parent=55 // pred_fallthru
          _
        // Predicated region
        $region65: #{attention_layer_forward.2} parent=55 // pred_check
          %p454 = pneg %p155
        $region66: #{attention_layer_forward.2} parent=55 // pred_check_branch
          %456 = sbr.rel (%p454) target = $region68
        $region67: #{attention_layer_forward.2} parent=55 // pred_region
          %457 = dma.done [#allocation9], 512
        $region68: #{attention_layer_forward.2} parent=55 // pred_fallthru
          _
        // Predicated region
        $region69: #{attention_layer_forward.2} parent=55 // pred_check
          %p458 = pneg %p176
        $region70: #{attention_layer_forward.2} parent=55 // pred_check_branch
          %460 = sbr.rel (%p458) target = $region72
        $region71: #{attention_layer_forward.2} parent=55 // pred_region
          %461 = dma.done [#allocation12], 16
        $region72: #{attention_layer_forward.2} parent=55 // pred_fallthru
          _
        // Predicated region
        $region73: #{attention_layer_forward.2} parent=55 // pred_check
          %p462 = pneg %p197
        $region74: #{attention_layer_forward.2} parent=55 // pred_check_branch
          %464 = sbr.rel (%p462) target = $region76
        $region75: #{attention_layer_forward.2} parent=55 // pred_region
          %465 = dma.done [#allocation12], 512
        $region76: #{attention_layer_forward.2} parent=55 // pred_fallthru
          _
        // Predicated region
        $region77: #{attention_layer_forward.2} parent=55 // pred_check
          %p466 = pneg %p218
        $region78: #{attention_layer_forward.2} parent=55 // pred_check_branch
          %468 = sbr.rel (%p466) target = $region80
        $region79: #{attention_layer_forward.2} parent=55 // pred_region
          %469 = dma.done [#allocation15], 16
        $region80: #{attention_layer_forward.2} parent=55 // pred_fallthru
          _
        // Predicated region
        $region81: #{attention_layer_forward.2} parent=55 // pred_check
          %p470 = pneg %p239
        $region82: #{attention_layer_forward.2} parent=55 // pred_check_branch
          %472 = sbr.rel (%p470) target = $region84
        $region83: #{attention_layer_forward.2} parent=55 // pred_region
          %473 = dma.done [#allocation15], 512
        $region84: #{attention_layer_forward.2} parent=55 // pred_fallthru
          _
        // Predicated region
        $region85: #{attention_layer_forward.2} parent=55 // pred_check
          %p474 = pneg %p260
        $region86: #{attention_layer_forward.2} parent=55 // pred_check_branch
          %476 = sbr.rel (%p474) target = $region88
        $region87: #{attention_layer_forward.2} parent=55 // pred_region
          %477 = dma.done [#allocation18], 16
        $region88: #{attention_layer_forward.2} parent=55 // pred_fallthru
          _
        %s478 = sand.u32 %s65, 1
        %s479 = scalar_lea.sflag [#allocation7], %s478
        %s480 = sand.u32 %s65, 1
        %s481 = smul.addr %s480, 8
        %s482 = scalar_lea.vmem [#allocation6], %s481
        %p483 = pneg %p78
        %p484 = pneg %p75
        %p485 = scmp.lt.s32.totalorder %s35, 1
        %s486 = scalar_select %p485, %s35, 1
        %p487 = scmp.lt.s32.totalorder %s38, 0
        %s488 = scalar_select %p487, %s38, 0
        %s489 = sadd.s32 %s488, %s486
        %s490 = smul.addr %s489, 8
        %s491 = scalar_lea.vmem %s1, %s490
        %p492 = pneg %p106
        %p493 = pneg %p103
        %s494 = sand.u32 %s29, 1
        %s495 = scalar_lea.sflag [#allocation9], %s494
        %s496 = sand.u32 %s121, 1
        %s497 = smul.addr %s496, 8
        %s498 = scalar_lea.vmem [#allocation8], %s497
        %p499 = pneg %p134
        %p500 = pneg %p131
        %p501 = pneg %p155
        %p502 = pneg %p152
        %p503 = pneg %p176
        %p504 = pneg %p173
        %p505 = pneg %p197
        %p506 = pneg %p194
        %p507 = pneg %p218
        %p508 = pneg %p215
        %p509 = pneg %p239
        %p510 = pneg %p236
        %p511 = pneg %p260
        %p512 = pneg %p257
        %p513 = pneg %p290
        %p514 = pneg %p287
        %s515 = smul.u32 4, %s37
        %p516 = scmp.lt.s32.totalorder %s35, 1
        %s517 = scalar_select %p516, %s35, 1
        %p518 = scmp.lt.s32.totalorder %s515, 3
        %s519 = scalar_select %p518, %s515, 3
        %p520 = scmp.lt.s32.totalorder %s36, 0
        %s521 = scalar_select %p520, %s36, 0
        %s522 = sadd.s32 %s521, %s519
        %s523 = smul.addr %s517, 4
        %s524 = sadd.s32 %s522, %s523
        %s525 = smul.addr %s524, 8
        %s526 = scalar_lea.vmem %s9, %s525
        %p527 = scmp.lt.s32.totalorder %s35, 1
        %s528 = scalar_select %p527, %s35, 1
        %p529 = scmp.lt.s32.totalorder %s38, 0
        %s530 = scalar_select %p529, %s38, 0
        %s531 = sadd.s32 %s530, %s528
        %s532 = smul.addr %s531, 8
        %s533 = scalar_lea.vmem %s1, %s532
        %s534 = smul.u32 4, %s37
        %p535 = scmp.lt.s32.totalorder %s35, 1
        %s536 = scalar_select %p535, %s35, 1
        %p537 = scmp.lt.s32.totalorder %s534, 3
        %s538 = scalar_select %p537, %s534, 3
        %p539 = scmp.lt.s32.totalorder %s36, 0
        %s540 = scalar_select %p539, %s36, 0
        %s541 = sadd.s32 %s540, %s538
        %s542 = smul.addr %s536, 4
        %s543 = sadd.s32 %s541, %s542
        %s544 = smul.addr %s543, 8
        %s545 = scalar_lea.vmem %s9, %s544
        %s546 = smul.u32 4, %s37
        %p547 = scmp.eq.s32.totalorder %s38, 0
        // Predicated region
        $region89: #{attention_layer_forward.2} parent=55 // pred_check
          %p548 = pneg %p547
        $region90: #{attention_layer_forward.2} parent=55 // pred_check_branch
          %550 = sbr.rel (%p548) target = $region92
        $region91: #{attention_layer_forward.2} parent=55 // pred_region
          %v551 = vld [vmem:[%s440] sm:$0xff]
          %s552 = smul.u32 %s37, 32
          %s553 = scalar_lea.vmem [#allocation10], %s552
          %v554 = vld [vmem:[%s553] sm:$0xff]
          %v555 = vld [vmem:[%s553 + $0x8] sm:$0xff]
          %v556 = vld [vmem:[%s553 + $0x10] sm:$0xff]
          %v557 = vld [vmem:[%s553 + $0x18] sm:$0xff]
          %s558 = scalar_lea.vmem [#allocation11], %s37
          %v559 = vld [vmem:[%s558] sm:$0x1]
          %v561 = vlaneseq
          %v562 = vshrl.u32 %v561, 7
          %v563 = vsub.s32 0, %v562
          %v564 = vrot.slane %v559, %v563
          %vm566 = vcmask 261120
          %v568 = vsel %vm566, %v551, 0
          %570 = vmatprep.subr.mxu0 0.0
          %571 = vmatpush1.msra.mxu0 0.0
          %572 = vmatprep.subr.mxu0 0.0
          %573 = vmatpush1.msra.mxu0 0.0
          %574 = vmatprep.subr.mxu0 0.0
          %575 = vmatpush1.msra.mxu0 0.0
          %576 = vmatprep.subr.mxu0 0.0
          %577 = vmatpush1.msra.mxu0 0.0
          %578 = vmatprep.subr.mxu0 0.0
          %579 = vmatpush1.msra.mxu0 0.0
          %580 = vmatprep.subr.mxu0 0.0
          %581 = vmatpush1.msra.mxu0 0.0
          %582 = vmatprep.subr.mxu0 0.0
          %583 = vmatpush1.msra.mxu0 0.0
          %584 = vmatprep.subr.mxu0 0.0
          %585 = vmatpush1.msra.mxu0 0.0
          %586 = vmatprep.subr.mxu0 0.0
          %587 = vmatpush1.msra.mxu0 0.0
          %588 = vmatprep.subr.mxu0 0.0
          %589 = vmatpush1.msra.mxu0 0.0
          %590 = vmatprep.subr.mxu0 0.0
          %591 = vmatpush1.msra.mxu0 0.0
          %592 = vmatprep.subr.mxu0 0.0
          %593 = vmatpush1.msra.mxu0 0.0
          %594 = vmatprep.subr.mxu0 0.0
          %595 = vmatpush1.msra.mxu0 %v557
          %596 = vmatprep.subr.mxu0 0.0
          %597 = vmatpush1.msra.mxu0 %v556
          %598 = vmatprep.subr.mxu0 0.0
          %599 = vmatpush1.msra.mxu0 %v555
          %600 = vmatprep.subr.mxu0 0.0
          %601 = vmatpush1.msra.mxu0 %v554
          %602 = vmatprep.subr.mxu0 0.0
          %603 = vmatpush2.msra.mxu0 0.0
          %604 = vmatprep.subr.mxu0 0.0
          %605 = vmatpush2.msra.mxu0 0.0
          %606 = vmatprep.subr.mxu0 0.0
          %607 = vmatpush2.msra.mxu0 0.0
          %608 = vmatprep.subr.mxu0 0.0
          %609 = vmatpush2.msra.mxu0 0.0
          %610 = vmatprep.subr.mxu0 0.0
          %611 = vmatpush2.msra.mxu0 0.0
          %612 = vmatprep.subr.mxu0 0.0
          %613 = vmatpush2.msra.mxu0 0.0
          %614 = vmatprep.subr.mxu0 0.0
          %615 = vmatpush2.msra.mxu0 0.0
          %616 = vmatprep.subr.mxu0 0.0
          %617 = vmatpush2.msra.mxu0 0.0
          %618 = vmatprep.subr.mxu0 0.0
          %619 = vmatpush2.msra.mxu0 0.0
          %620 = vmatprep.subr.mxu0 0.0
          %621 = vmatpush2.msra.mxu0 0.0
          %622 = vmatprep.subr.mxu0 0.0
          %623 = vmatpush2.msra.mxu0 0.0
          %624 = vmatprep.subr.mxu0 0.0
          %625 = vmatpush2.msra.mxu0 0.0
          %626 = vmatprep.subr.mxu0 0.0
          %627 = vmatpush2.msra.mxu0 0.0
          %628 = vmatprep.subr.mxu0 0.0
          %629 = vmatpush2.msra.mxu0 0.0
          %630 = vmatprep.subr.mxu0 0.0
          %631 = vmatpush2.msra.mxu0 0.0
          %632 = vmatprep.subr.mxu0 0.0
          %633 = vmatpush2.msra.mxu0 0.0
          %634 = vmatprep.mubr.f32.mxu0 0.0
          %635 = vmatmul.mubr.f32.gmra.mxu0 %v568
          %v636 = vpop.f32.mrf.mxu0
          %v637 = vadd.f32 %v564, %v636
          %v638 = vpop.f32.mrf.mxu0
          %639 = vdwg.mxu0
          %640 = vst.msk [vmem:[#allocation2] sm:$0xff] %vm566, %v637
          %vm641 = vcmask 7168
          %642 = vst.msk [vmem:[#allocation3] sm:$0xff] %vm641, -inf
          %643 = vst.msk [vmem:[#allocation3 + $0x8] sm:$0xff] %vm641, -inf
          %644 = vst.msk [vmem:[#allocation3 + $0x10] sm:$0xff] %vm641, -inf
          %645 = vst.msk [vmem:[#allocation3 + $0x18] sm:$0xff] %vm641, -inf
          %646 = vst.msk [vmem:[#allocation4] sm:$0xff] %vm641, 0.0
          %647 = vst.msk [vmem:[#allocation4 + $0x8] sm:$0xff] %vm641, 0.0
          %648 = vst.msk [vmem:[#allocation4 + $0x10] sm:$0xff] %vm641, 0.0
          %649 = vst.msk [vmem:[#allocation4 + $0x18] sm:$0xff] %vm641, 0.0
          %vm650 = vcmask 64512
          %651 = vst.msk [vmem:[#allocation5] sm:$0xff] %vm650, 0.0
          %652 = vst.msk [vmem:[#allocation5 + $0x8] sm:$0xff] %vm650, 0.0
          %653 = vst.msk [vmem:[#allocation5 + $0x10] sm:$0xff] %vm650, 0.0
          %654 = vst.msk [vmem:[#allocation5 + $0x18] sm:$0xff] %vm650, 0.0
        $region92: #{attention_layer_forward.2} parent=55 // pred_fallthru
          _
        %v655 = vld [vmem:[%s533] sm:$0xff]
        %s656 = smul.u32 %s37, 32
        %s657 = scalar_lea.vmem [#allocation13], %s656
        %v658 = vld [vmem:[%s657] sm:$0xff]
        %v659 = vld [vmem:[%s657 + $0x8] sm:$0xff]
        %v660 = vld [vmem:[%s657 + $0x10] sm:$0xff]
        %v661 = vld [vmem:[%s657 + $0x18] sm:$0xff]
        %s662 = scalar_lea.vmem [#allocation14], %s37
        %v663 = vld [vmem:[%s662] sm:$0x1]
        %v665 = vlaneseq
        %v666 = vshrl.u32 %v665, 7
        %v667 = vsub.s32 0, %v666
        %v668 = vrot.slane %v663, %v667
        %vm670 = vcmask 261120
        %v672 = vsel %vm670, %v655, 0
        %674 = vmatprep.subr.mxu0 0.0
        %675 = vmatpush1.msra.mxu0 0.0
        %676 = vmatprep.subr.mxu0 0.0
        %677 = vmatpush1.msra.mxu0 0.0
        %678 = vmatprep.subr.mxu0 0.0
        %679 = vmatpush1.msra.mxu0 0.0
        %680 = vmatprep.subr.mxu0 0.0
        %681 = vmatpush1.msra.mxu0 0.0
        %682 = vmatprep.subr.mxu0 0.0
        %683 = vmatpush1.msra.mxu0 0.0
        %684 = vmatprep.subr.mxu0 0.0
        %685 = vmatpush1.msra.mxu0 0.0
        %686 = vmatprep.subr.mxu0 0.0
        %687 = vmatpush1.msra.mxu0 0.0
        %688 = vmatprep.subr.mxu0 0.0
        %689 = vmatpush1.msra.mxu0 0.0
        %690 = vmatprep.subr.mxu0 0.0
        %691 = vmatpush1.msra.mxu0 0.0
        %692 = vmatprep.subr.mxu0 0.0
        %693 = vmatpush1.msra.mxu0 0.0
        %694 = vmatprep.subr.mxu0 0.0
        %695 = vmatpush1.msra.mxu0 0.0
        %696 = vmatprep.subr.mxu0 0.0
        %697 = vmatpush1.msra.mxu0 0.0
        %698 = vmatprep.subr.mxu0 0.0
        %699 = vmatpush1.msra.mxu0 %v661
        %700 = vmatprep.subr.mxu0 0.0
        %701 = vmatpush1.msra.mxu0 %v660
        %702 = vmatprep.subr.mxu0 0.0
        %703 = vmatpush1.msra.mxu0 %v659
        %704 = vmatprep.subr.mxu0 0.0
        %705 = vmatpush1.msra.mxu0 %v658
        %706 = vmatprep.subr.mxu0 0.0
        %707 = vmatpush2.msra.mxu0 0.0
        %708 = vmatprep.subr.mxu0 0.0
        %709 = vmatpush2.msra.mxu0 0.0
        %710 = vmatprep.subr.mxu0 0.0
        %711 = vmatpush2.msra.mxu0 0.0
        %712 = vmatprep.subr.mxu0 0.0
        %713 = vmatpush2.msra.mxu0 0.0
        %714 = vmatprep.subr.mxu0 0.0
        %715 = vmatpush2.msra.mxu0 0.0
        %716 = vmatprep.subr.mxu0 0.0
        %717 = vmatpush2.msra.mxu0 0.0
        %718 = vmatprep.subr.mxu0 0.0
        %719 = vmatpush2.msra.mxu0 0.0
        %720 = vmatprep.subr.mxu0 0.0
        %721 = vmatpush2.msra.mxu0 0.0
        %722 = vmatprep.subr.mxu0 0.0
        %723 = vmatpush2.msra.mxu0 0.0
        %724 = vmatprep.subr.mxu0 0.0
        %725 = vmatpush2.msra.mxu0 0.0
        %726 = vmatprep.subr.mxu0 0.0
        %727 = vmatpush2.msra.mxu0 0.0
        %728 = vmatprep.subr.mxu0 0.0
        %729 = vmatpush2.msra.mxu0 0.0
        %730 = vmatprep.subr.mxu0 0.0
        %731 = vmatpush2.msra.mxu0 0.0
        %732 = vmatprep.subr.mxu0 0.0
        %733 = vmatpush2.msra.mxu0 0.0
        %734 = vmatprep.subr.mxu0 0.0
        %735 = vmatpush2.msra.mxu0 0.0
        %736 = vmatprep.subr.mxu0 0.0
        %737 = vmatpush2.msra.mxu0 0.0
        %738 = vmatprep.mubr.f32.mxu0 0.0
        %739 = vmatmul.mubr.f32.gmra.mxu0 %v672
        %v740 = vpop.f32.mrf.mxu0
        %v741 = vadd.f32 %v668, %v740
        %v742 = vpop.f32.mrf.mxu0
        %743 = vdwg.mxu0
        %v744 = vld [vmem:[%s449] sm:$0xff]
        %s745 = scalar_lea.vmem [#allocation16], %s656
        %v746 = vld [vmem:[%s745] sm:$0xff]
        %v747 = vld [vmem:[%s745 + $0x8] sm:$0xff]
        %v748 = vld [vmem:[%s745 + $0x10] sm:$0xff]
        %v749 = vld [vmem:[%s745 + $0x18] sm:$0xff]
        %s750 = scalar_lea.vmem [#allocation17], %s37
        %v751 = vld [vmem:[%s750] sm:$0x1]
        %v753 = vlaneseq
        %v754 = vshrl.u32 %v753, 7
        %v755 = vsub.s32 0, %v754
        %v756 = vrot.slane %v751, %v755
        %v759 = vsel %vm670, %v744, 0
        %761 = vmatprep.subr.mxu0 0.0
        %762 = vmatpush1.msra.mxu0 0.0
        %763 = vmatprep.subr.mxu0 0.0
        %764 = vmatpush1.msra.mxu0 0.0
        %765 = vmatprep.subr.mxu0 0.0
        %766 = vmatpush1.msra.mxu0 0.0
        %767 = vmatprep.subr.mxu0 0.0
        %768 = vmatpush1.msra.mxu0 0.0
        %769 = vmatprep.subr.mxu0 0.0
        %770 = vmatpush1.msra.mxu0 0.0
        %771 = vmatprep.subr.mxu0 0.0
        %772 = vmatpush1.msra.mxu0 0.0
        %773 = vmatprep.subr.mxu0 0.0
        %774 = vmatpush1.msra.mxu0 0.0
        %775 = vmatprep.subr.mxu0 0.0
        %776 = vmatpush1.msra.mxu0 0.0
        %777 = vmatprep.subr.mxu0 0.0
        %778 = vmatpush1.msra.mxu0 0.0
        %779 = vmatprep.subr.mxu0 0.0
        %780 = vmatpush1.msra.mxu0 0.0
        %781 = vmatprep.subr.mxu0 0.0
        %782 = vmatpush1.msra.mxu0 0.0
        %783 = vmatprep.subr.mxu0 0.0
        %784 = vmatpush1.msra.mxu0 0.0
        %785 = vmatprep.subr.mxu0 0.0
        %786 = vmatpush1.msra.mxu0 %v749
        %787 = vmatprep.subr.mxu0 0.0
        %788 = vmatpush1.msra.mxu0 %v748
        %789 = vmatprep.subr.mxu0 0.0
        %790 = vmatpush1.msra.mxu0 %v747
        %791 = vmatprep.subr.mxu0 0.0
        %792 = vmatpush1.msra.mxu0 %v746
        %793 = vmatprep.subr.mxu0 0.0
        %794 = vmatpush2.msra.mxu0 0.0
        %795 = vmatprep.subr.mxu0 0.0
        %796 = vmatpush2.msra.mxu0 0.0
        %797 = vmatprep.subr.mxu0 0.0
        %798 = vmatpush2.msra.mxu0 0.0
        %799 = vmatprep.subr.mxu0 0.0
        %800 = vmatpush2.msra.mxu0 0.0
        %801 = vmatprep.subr.mxu0 0.0
        %802 = vmatpush2.msra.mxu0 0.0
        %803 = vmatprep.subr.mxu0 0.0
        %804 = vmatpush2.msra.mxu0 0.0
        %805 = vmatprep.subr.mxu0 0.0
        %806 = vmatpush2.msra.mxu0 0.0
        %807 = vmatprep.subr.mxu0 0.0
        %808 = vmatpush2.msra.mxu0 0.0
        %809 = vmatprep.subr.mxu0 0.0
        %810 = vmatpush2.msra.mxu0 0.0
        %811 = vmatprep.subr.mxu0 0.0
        %812 = vmatpush2.msra.mxu0 0.0
        %813 = vmatprep.subr.mxu0 0.0
        %814 = vmatpush2.msra.mxu0 0.0
        %815 = vmatprep.subr.mxu0 0.0
        %816 = vmatpush2.msra.mxu0 0.0
        %817 = vmatprep.subr.mxu0 0.0
        %818 = vmatpush2.msra.mxu0 0.0
        %819 = vmatprep.subr.mxu0 0.0
        %820 = vmatpush2.msra.mxu0 0.0
        %821 = vmatprep.subr.mxu0 0.0
        %822 = vmatpush2.msra.mxu0 0.0
        %823 = vmatprep.subr.mxu0 0.0
        %824 = vmatpush2.msra.mxu0 0.0
        %825 = vmatprep.mubr.f32.mxu0 0.0
        %826 = vmatmul.mubr.f32.gmra.mxu0 %v759
        %v827 = vpop.f32.mrf.mxu0
        %v828 = vadd.f32 %v756, %v827
        %v829 = vpop.f32.mrf.mxu0
        %830 = vdwg.mxu0
        %v831 = vld [vmem:[#allocation2] sm:$0xff]
        %vm832 = vcmask 64512
        %v834 = vsel %vm832, %v831, 0
        %v837 = vsel %vm832, %v741, 0
        %839 = vmatprep.subr.mxu0 0.0
        %840 = vmatpush1.xpose.msra.mxu0 0.0
        %841 = vmatprep.subr.mxu0 0.0
        %842 = vmatpush1.xpose.msra.mxu0 0.0
        %843 = vmatprep.subr.mxu0 0.0
        %844 = vmatpush1.xpose.msra.mxu0 0.0
        %845 = vmatprep.subr.mxu0 0.0
        %846 = vmatpush1.xpose.msra.mxu0 0.0
        %847 = vmatprep.subr.mxu0 0.0
        %848 = vmatpush1.xpose.msra.mxu0 0.0
        %849 = vmatprep.subr.mxu0 0.0
        %850 = vmatpush1.xpose.msra.mxu0 0.0
        %851 = vmatprep.subr.mxu0 0.0
        %852 = vmatpush1.xpose.msra.mxu0 0.0
        %853 = vmatprep.subr.mxu0 0.0
        %854 = vmatpush1.xpose.msra.mxu0 0.0
        %855 = vmatprep.subr.mxu0 0.0
        %856 = vmatpush1.xpose.msra.mxu0 0.0
        %857 = vmatprep.subr.mxu0 0.0
        %858 = vmatpush1.xpose.msra.mxu0 0.0
        %859 = vmatprep.subr.mxu0 0.0
        %860 = vmatpush1.xpose.msra.mxu0 0.0
        %861 = vmatprep.subr.mxu0 0.0
        %862 = vmatpush1.xpose.msra.mxu0 0.0
        %863 = vmatprep.subr.mxu0 0.0
        %864 = vmatpush1.xpose.msra.mxu0 0.0
        %865 = vmatprep.subr.mxu0 0.0
        %866 = vmatpush1.xpose.msra.mxu0 0.0
        %867 = vmatprep.subr.mxu0 0.0
        %868 = vmatpush1.xpose.msra.mxu0 0.0
        %869 = vmatprep.subr.mxu0 0.0
        %870 = vmatpush1.xpose.msra.mxu0 %v837
        %871 = vmatprep.subr.mxu0 0.0
        %872 = vmatpush2.xpose.msra.mxu0 0.0
        %873 = vmatprep.subr.mxu0 0.0
        %874 = vmatpush2.xpose.msra.mxu0 0.0
        %875 = vmatprep.subr.mxu0 0.0
        %876 = vmatpush2.xpose.msra.mxu0 0.0
        %877 = vmatprep.subr.mxu0 0.0
        %878 = vmatpush2.xpose.msra.mxu0 0.0
        %879 = vmatprep.subr.mxu0 0.0
        %880 = vmatpush2.xpose.msra.mxu0 0.0
        %881 = vmatprep.subr.mxu0 0.0
        %882 = vmatpush2.xpose.msra.mxu0 0.0
        %883 = vmatprep.subr.mxu0 0.0
        %884 = vmatpush2.xpose.msra.mxu0 0.0
        %885 = vmatprep.subr.mxu0 0.0
        %886 = vmatpush2.xpose.msra.mxu0 0.0
        %887 = vmatprep.subr.mxu0 0.0
        %888 = vmatpush2.xpose.msra.mxu0 0.0
        %889 = vmatprep.subr.mxu0 0.0
        %890 = vmatpush2.xpose.msra.mxu0 0.0
        %891 = vmatprep.subr.mxu0 0.0
        %892 = vmatpush2.xpose.msra.mxu0 0.0
        %893 = vmatprep.subr.mxu0 0.0
        %894 = vmatpush2.xpose.msra.mxu0 0.0
        %895 = vmatprep.subr.mxu0 0.0
        %896 = vmatpush2.xpose.msra.mxu0 0.0
        %897 = vmatprep.subr.mxu0 0.0
        %898 = vmatpush2.xpose.msra.mxu0 0.0
        %899 = vmatprep.subr.mxu0 0.0
        %900 = vmatpush2.xpose.msra.mxu0 0.0
        %901 = vmatprep.subr.mxu0 0.0
        %902 = vmatpush2.xpose.msra.mxu0 0.0
        %903 = vmatprep.mubr.f32.mxu0 0.0
        %904 = vmatmul.mubr.f32.gmra.mxu0 %v834
        %v905 = vpop.f32.mrf.mxu0
        %v906 = vadd.f32 0.0, %v905
        %v907 = vpop.f32.mrf.mxu0
        %908 = vdwg.mxu0
        %v909 = vld [vmem:[#allocation3] sm:$0xff]
        %v910 = vsel %vm832, %v906, -inf
        %911 = vmax.xlane.f32.xlu0 %v910
        %v912 = vpop.xlane.xlu0 %911
        %v913 = vmax.f32 %v909, %v912
        %v914 = vsub.f32 %v909, %v913
        %v915 = vmul.f32 %v914, 1.442695
        %v916 = vpow.pop %v915
        %918 = vset.pattern.permute.xlu0 0
        %919 = vperm.xlu0 %918, %v913
        %v920 = vpop.permute.xlu0 %919
        %v922 = vsub.f32 %v906, %v920
        %v923 = vmul.f32 %v922, 1.442695
        %v924 = vpow.pop %v923
        %v925 = vld [vmem:[#allocation4] sm:$0xff]
        %v926 = vmul.f32 %v916, %v925
        %v927 = vsel %vm832, %v924, 0.0
        %928 = vadd.xlane.f32.xlu0 %v927
        %v929 = vpop.xlane.xlu0 %928
        %v930 = vadd.f32 %v926, %v929
        %vm931 = vcmask 7168
        %932 = vst.msk [vmem:[#allocation4] sm:$0xff] %vm931, %v930
        %v933 = vld [vmem:[#allocation5] sm:$0xff]
        %935 = vset.pattern.permute.xlu0 0
        %936 = vperm.xlu0 %935, %v916
        %v937 = vpop.permute.xlu0 %936
        %v939 = vmul.f32 %v937, %v933
        %v941 = vsel %vm832, %v924, 0
        %943 = vmatprep.subr.mxu0 0.0
        %944 = vmatpush1.msra.mxu0 0.0
        %945 = vmatprep.subr.mxu0 0.0
        %946 = vmatpush1.msra.mxu0 0.0
        %947 = vmatprep.subr.mxu0 0.0
        %948 = vmatpush1.msra.mxu0 0.0
        %949 = vmatprep.subr.mxu0 0.0
        %950 = vmatpush1.msra.mxu0 0.0
        %951 = vmatprep.subr.mxu0 0.0
        %952 = vmatpush1.msra.mxu0 0.0
        %953 = vmatprep.subr.mxu0 0.0
        %954 = vmatpush1.msra.mxu0 0.0
        %955 = vmatprep.subr.mxu0 0.0
        %956 = vmatpush1.msra.mxu0 0.0
        %957 = vmatprep.subr.mxu0 0.0
        %958 = vmatpush1.msra.mxu0 0.0
        %959 = vmatprep.subr.mxu0 0.0
        %960 = vmatpush1.msra.mxu0 0.0
        %961 = vmatprep.subr.mxu0 0.0
        %962 = vmatpush1.msra.mxu0 0.0
        %963 = vmatprep.subr.mxu0 0.0
        %964 = vmatpush1.msra.mxu0 0.0
        %965 = vmatprep.subr.mxu0 0.0
        %966 = vmatpush1.msra.mxu0 0.0
        %967 = vmatprep.subr.mxu0 0.0
        %968 = vmatpush1.msra.mxu0 0.0
        %969 = vmatprep.subr.mxu0 0.0
        %970 = vmatpush1.msra.mxu0 0.0
        %971 = vmatprep.subr.mxu0 0.0
        %972 = vmatpush1.msra.mxu0 0.0
        %973 = vmatprep.subr.mxu0 0.0
        %974 = vmatpush1.msra.mxu0 %v828
        %975 = vmatprep.subr.mxu0 0.0
        %976 = vmatpush2.msra.mxu0 0.0
        %977 = vmatprep.subr.mxu0 0.0
        %978 = vmatpush2.msra.mxu0 0.0
        %979 = vmatprep.subr.mxu0 0.0
        %980 = vmatpush2.msra.mxu0 0.0
        %981 = vmatprep.subr.mxu0 0.0
        %982 = vmatpush2.msra.mxu0 0.0
        %983 = vmatprep.subr.mxu0 0.0
        %984 = vmatpush2.msra.mxu0 0.0
        %985 = vmatprep.subr.mxu0 0.0
        %986 = vmatpush2.msra.mxu0 0.0
        %987 = vmatprep.subr.mxu0 0.0
        %988 = vmatpush2.msra.mxu0 0.0
        %989 = vmatprep.subr.mxu0 0.0
        %990 = vmatpush2.msra.mxu0 0.0
        %991 = vmatprep.subr.mxu0 0.0
        %992 = vmatpush2.msra.mxu0 0.0
        %993 = vmatprep.subr.mxu0 0.0
        %994 = vmatpush2.msra.mxu0 0.0
        %995 = vmatprep.subr.mxu0 0.0
        %996 = vmatpush2.msra.mxu0 0.0
        %997 = vmatprep.subr.mxu0 0.0
        %998 = vmatpush2.msra.mxu0 0.0
        %999 = vmatprep.subr.mxu0 0.0
        %1000 = vmatpush2.msra.mxu0 0.0
        %1001 = vmatprep.subr.mxu0 0.0
        %1002 = vmatpush2.msra.mxu0 0.0
        %1003 = vmatprep.subr.mxu0 0.0
        %1004 = vmatpush2.msra.mxu0 0.0
        %1005 = vmatprep.subr.mxu0 0.0
        %1006 = vmatpush2.msra.mxu0 0.0
        %1007 = vmatprep.mubr.f32.mxu0 0.0
        %1008 = vmatmul.mubr.f32.gmra.mxu0 %v941
        %v1009 = vpop.f32.mrf.mxu0
        %v1010 = vadd.f32 0.0, %v1009
        %v1011 = vpop.f32.mrf.mxu0
        %1012 = vdwg.mxu0
        %v1013 = vadd.f32 %v939, %v1010
        %1014 = vst.msk [vmem:[#allocation5] sm:$0xff] %vm832, %v1013
        %1015 = vst.msk [vmem:[#allocation3] sm:$0xff] %vm931, %v913
        %v1016 = vld [vmem:[#allocation2] sm:$0xff]
        %1018 = vrot.lane.b32.xlu0 %v1016, 120
        %v1019 = vpop.permute.xlu0 %1018
        %1020 = vrot.lane.b32.xlu0 %v741, 120
        %v1021 = vpop.permute.xlu0 %1020
        %v1022 = vsel %vm832, %v1019, 0
        %v1024 = vsel %vm832, %v1021, 0
        %1026 = vmatprep.subr.mxu0 0.0
        %1027 = vmatpush1.xpose.msra.mxu0 0.0
        %1028 = vmatprep.subr.mxu0 0.0
        %1029 = vmatpush1.xpose.msra.mxu0 0.0
        %1030 = vmatprep.subr.mxu0 0.0
        %1031 = vmatpush1.xpose.msra.mxu0 0.0
        %1032 = vmatprep.subr.mxu0 0.0
        %1033 = vmatpush1.xpose.msra.mxu0 0.0
        %1034 = vmatprep.subr.mxu0 0.0
        %1035 = vmatpush1.xpose.msra.mxu0 0.0
        %1036 = vmatprep.subr.mxu0 0.0
        %1037 = vmatpush1.xpose.msra.mxu0 0.0
        %1038 = vmatprep.subr.mxu0 0.0
        %1039 = vmatpush1.xpose.msra.mxu0 0.0
        %1040 = vmatprep.subr.mxu0 0.0
        %1041 = vmatpush1.xpose.msra.mxu0 0.0
        %1042 = vmatprep.subr.mxu0 0.0
        %1043 = vmatpush1.xpose.msra.mxu0 0.0
        %1044 = vmatprep.subr.mxu0 0.0
        %1045 = vmatpush1.xpose.msra.mxu0 0.0
        %1046 = vmatprep.subr.mxu0 0.0
        %1047 = vmatpush1.xpose.msra.mxu0 0.0
        %1048 = vmatprep.subr.mxu0 0.0
        %1049 = vmatpush1.xpose.msra.mxu0 0.0
        %1050 = vmatprep.subr.mxu0 0.0
        %1051 = vmatpush1.xpose.msra.mxu0 0.0
        %1052 = vmatprep.subr.mxu0 0.0
        %1053 = vmatpush1.xpose.msra.mxu0 0.0
        %1054 = vmatprep.subr.mxu0 0.0
        %1055 = vmatpush1.xpose.msra.mxu0 0.0
        %1056 = vmatprep.subr.mxu0 0.0
        %1057 = vmatpush1.xpose.msra.mxu0 %v1024
        %1058 = vmatprep.subr.mxu0 0.0
        %1059 = vmatpush2.xpose.msra.mxu0 0.0
        %1060 = vmatprep.subr.mxu0 0.0
        %1061 = vmatpush2.xpose.msra.mxu0 0.0
        %1062 = vmatprep.subr.mxu0 0.0
        %1063 = vmatpush2.xpose.msra.mxu0 0.0
        %1064 = vmatprep.subr.mxu0 0.0
        %1065 = vmatpush2.xpose.msra.mxu0 0.0
        %1066 = vmatprep.subr.mxu0 0.0
        %1067 = vmatpush2.xpose.msra.mxu0 0.0
        %1068 = vmatprep.subr.mxu0 0.0
        %1069 = vmatpush2.xpose.msra.mxu0 0.0
        %1070 = vmatprep.subr.mxu0 0.0
        %1071 = vmatpush2.xpose.msra.mxu0 0.0
        %1072 = vmatprep.subr.mxu0 0.0
        %1073 = vmatpush2.xpose.msra.mxu0 0.0
        %1074 = vmatprep.subr.mxu0 0.0
        %1075 = vmatpush2.xpose.msra.mxu0 0.0
        %1076 = vmatprep.subr.mxu0 0.0
        %1077 = vmatpush2.xpose.msra.mxu0 0.0
        %1078 = vmatprep.subr.mxu0 0.0
        %1079 = vmatpush2.xpose.msra.mxu0 0.0
        %1080 = vmatprep.subr.mxu0 0.0
        %1081 = vmatpush2.xpose.msra.mxu0 0.0
        %1082 = vmatprep.subr.mxu0 0.0
        %1083 = vmatpush2.xpose.msra.mxu0 0.0
        %1084 = vmatprep.subr.mxu0 0.0
        %1085 = vmatpush2.xpose.msra.mxu0 0.0
        %1086 = vmatprep.subr.mxu0 0.0
        %1087 = vmatpush2.xpose.msra.mxu0 0.0
        %1088 = vmatprep.subr.mxu0 0.0
        %1089 = vmatpush2.xpose.msra.mxu0 0.0
        %1090 = vmatprep.mubr.f32.mxu0 0.0
        %1091 = vmatmul.mubr.f32.gmra.mxu0 %v1022
        %v1092 = vpop.f32.mrf.mxu0
        %v1093 = vadd.f32 0.0, %v1092
        %v1094 = vpop.f32.mrf.mxu0
        %1095 = vdwg.mxu0
        %s1096 = scalar_lea.vmem [#allocation3], 8
        %v1097 = vld [vmem:[%s1096] sm:$0xff]
        %v1098 = vsel %vm832, %v1093, -inf
        %1099 = vmax.xlane.f32.xlu0 %v1098
        %v1100 = vpop.xlane.xlu0 %1099
        %v1101 = vmax.f32 %v1097, %v1100
        %v1102 = vsub.f32 %v1097, %v1101
        %v1103 = vmul.f32 %v1102, 1.442695
        %v1104 = vpow.pop %v1103
        %1106 = vset.pattern.permute.xlu0 0
        %1107 = vperm.xlu0 %1106, %v1101
        %v1108 = vpop.permute.xlu0 %1107
        %v1110 = vsub.f32 %v1093, %v1108
        %v1111 = vmul.f32 %v1110, 1.442695
        %v1112 = vpow.pop %v1111
        %s1113 = scalar_lea.vmem [#allocation4], 8
        %v1114 = vld [vmem:[%s1113] sm:$0xff]
        %v1115 = vmul.f32 %v1104, %v1114
        %v1116 = vsel %vm832, %v1112, 0.0
        %1117 = vadd.xlane.f32.xlu0 %v1116
        %v1118 = vpop.xlane.xlu0 %1117
        %v1119 = vadd.f32 %v1115, %v1118
        %1120 = vst.msk [vmem:[%s1113] sm:$0xff] %vm931, %v1119
        %s1121 = scalar_lea.vmem [#allocation5], 8
        %v1122 = vld [vmem:[%s1121] sm:$0xff]
        %1124 = vset.pattern.permute.xlu0 0
        %1125 = vperm.xlu0 %1124, %v1104
        %v1126 = vpop.permute.xlu0 %1125
        %v1128 = vmul.f32 %v1126, %v1122
        %1130 = vrot.lane.b32.xlu0 %v828, 120
        %v1131 = vpop.permute.xlu0 %1130
        %v1134 = vsel %vm832, %v1112, 0
        %1136 = vmatprep.subr.mxu0 0.0
        %1137 = vmatpush1.msra.mxu0 0.0
        %1138 = vmatprep.subr.mxu0 0.0
        %1139 = vmatpush1.msra.mxu0 0.0
        %1140 = vmatprep.subr.mxu0 0.0
        %1141 = vmatpush1.msra.mxu0 0.0
        %1142 = vmatprep.subr.mxu0 0.0
        %1143 = vmatpush1.msra.mxu0 0.0
        %1144 = vmatprep.subr.mxu0 0.0
        %1145 = vmatpush1.msra.mxu0 0.0
        %1146 = vmatprep.subr.mxu0 0.0
        %1147 = vmatpush1.msra.mxu0 0.0
        %1148 = vmatprep.subr.mxu0 0.0
        %1149 = vmatpush1.msra.mxu0 0.0
        %1150 = vmatprep.subr.mxu0 0.0
        %1151 = vmatpush1.msra.mxu0 0.0
        %1152 = vmatprep.subr.mxu0 0.0
        %1153 = vmatpush1.msra.mxu0 0.0
        %1154 = vmatprep.subr.mxu0 0.0
        %1155 = vmatpush1.msra.mxu0 0.0
        %1156 = vmatprep.subr.mxu0 0.0
        %1157 = vmatpush1.msra.mxu0 0.0
        %1158 = vmatprep.subr.mxu0 0.0
        %1159 = vmatpush1.msra.mxu0 0.0
        %1160 = vmatprep.subr.mxu0 0.0
        %1161 = vmatpush1.msra.mxu0 0.0
        %1162 = vmatprep.subr.mxu0 0.0
        %1163 = vmatpush1.msra.mxu0 0.0
        %1164 = vmatprep.subr.mxu0 0.0
        %1165 = vmatpush1.msra.mxu0 0.0
        %1166 = vmatprep.subr.mxu0 0.0
        %1167 = vmatpush1.msra.mxu0 %v1131
        %1168 = vmatprep.subr.mxu0 0.0
        %1169 = vmatpush2.msra.mxu0 0.0
        %1170 = vmatprep.subr.mxu0 0.0
        %1171 = vmatpush2.msra.mxu0 0.0
        %1172 = vmatprep.subr.mxu0 0.0
        %1173 = vmatpush2.msra.mxu0 0.0
        %1174 = vmatprep.subr.mxu0 0.0
        %1175 = vmatpush2.msra.mxu0 0.0
        %1176 = vmatprep.subr.mxu0 0.0
        %1177 = vmatpush2.msra.mxu0 0.0
        %1178 = vmatprep.subr.mxu0 0.0
        %1179 = vmatpush2.msra.mxu0 0.0
        %1180 = vmatprep.subr.mxu0 0.0
        %1181 = vmatpush2.msra.mxu0 0.0
        %1182 = vmatprep.subr.mxu0 0.0
        %1183 = vmatpush2.msra.mxu0 0.0
        %1184 = vmatprep.subr.mxu0 0.0
        %1185 = vmatpush2.msra.mxu0 0.0
        %1186 = vmatprep.subr.mxu0 0.0
        %1187 = vmatpush2.msra.mxu0 0.0
        %1188 = vmatprep.subr.mxu0 0.0
        %1189 = vmatpush2.msra.mxu0 0.0
        %1190 = vmatprep.subr.mxu0 0.0
        %1191 = vmatpush2.msra.mxu0 0.0
        %1192 = vmatprep.subr.mxu0 0.0
        %1193 = vmatpush2.msra.mxu0 0.0
        %1194 = vmatprep.subr.mxu0 0.0
        %1195 = vmatpush2.msra.mxu0 0.0
        %1196 = vmatprep.subr.mxu0 0.0
        %1197 = vmatpush2.msra.mxu0 0.0
        %1198 = vmatprep.subr.mxu0 0.0
        %1199 = vmatpush2.msra.mxu0 0.0
        %1200 = vmatprep.mubr.f32.mxu0 0.0
        %1201 = vmatmul.mubr.f32.gmra.mxu0 %v1134
        %v1202 = vpop.f32.mrf.mxu0
        %v1203 = vadd.f32 0.0, %v1202
        %v1204 = vpop.f32.mrf.mxu0
        %1205 = vdwg.mxu0
        %v1206 = vadd.f32 %v1128, %v1203
        %1207 = vst.msk [vmem:[%s1121] sm:$0xff] %vm832, %v1206
        %1208 = vst.msk [vmem:[%s1096] sm:$0xff] %vm931, %v1101
        %v1209 = vld [vmem:[#allocation2] sm:$0xff]
        %1211 = vrot.lane.b32.xlu0 %v1209, 112
        %v1212 = vpop.permute.xlu0 %1211
        %1213 = vrot.lane.b32.xlu0 %v741, 112
        %v1214 = vpop.permute.xlu0 %1213
        %v1215 = vsel %vm832, %v1212, 0
        %v1217 = vsel %vm832, %v1214, 0
        %1219 = vmatprep.subr.mxu0 0.0
        %1220 = vmatpush1.xpose.msra.mxu0 0.0
        %1221 = vmatprep.subr.mxu0 0.0
        %1222 = vmatpush1.xpose.msra.mxu0 0.0
        %1223 = vmatprep.subr.mxu0 0.0
        %1224 = vmatpush1.xpose.msra.mxu0 0.0
        %1225 = vmatprep.subr.mxu0 0.0
        %1226 = vmatpush1.xpose.msra.mxu0 0.0
        %1227 = vmatprep.subr.mxu0 0.0
        %1228 = vmatpush1.xpose.msra.mxu0 0.0
        %1229 = vmatprep.subr.mxu0 0.0
        %1230 = vmatpush1.xpose.msra.mxu0 0.0
        %1231 = vmatprep.subr.mxu0 0.0
        %1232 = vmatpush1.xpose.msra.mxu0 0.0
        %1233 = vmatprep.subr.mxu0 0.0
        %1234 = vmatpush1.xpose.msra.mxu0 0.0
        %1235 = vmatprep.subr.mxu0 0.0
        %1236 = vmatpush1.xpose.msra.mxu0 0.0
        %1237 = vmatprep.subr.mxu0 0.0
        %1238 = vmatpush1.xpose.msra.mxu0 0.0
        %1239 = vmatprep.subr.mxu0 0.0
        %1240 = vmatpush1.xpose.msra.mxu0 0.0
        %1241 = vmatprep.subr.mxu0 0.0
        %1242 = vmatpush1.xpose.msra.mxu0 0.0
        %1243 = vmatprep.subr.mxu0 0.0
        %1244 = vmatpush1.xpose.msra.mxu0 0.0
        %1245 = vmatprep.subr.mxu0 0.0
        %1246 = vmatpush1.xpose.msra.mxu0 0.0
        %1247 = vmatprep.subr.mxu0 0.0
        %1248 = vmatpush1.xpose.msra.mxu0 0.0
        %1249 = vmatprep.subr.mxu0 0.0
        %1250 = vmatpush1.xpose.msra.mxu0 %v1217
        %1251 = vmatprep.subr.mxu0 0.0
        %1252 = vmatpush2.xpose.msra.mxu0 0.0
        %1253 = vmatprep.subr.mxu0 0.0
        %1254 = vmatpush2.xpose.msra.mxu0 0.0
        %1255 = vmatprep.subr.mxu0 0.0
        %1256 = vmatpush2.xpose.msra.mxu0 0.0
        %1257 = vmatprep.subr.mxu0 0.0
        %1258 = vmatpush2.xpose.msra.mxu0 0.0
        %1259 = vmatprep.subr.mxu0 0.0
        %1260 = vmatpush2.xpose.msra.mxu0 0.0
        %1261 = vmatprep.subr.mxu0 0.0
        %1262 = vmatpush2.xpose.msra.mxu0 0.0
        %1263 = vmatprep.subr.mxu0 0.0
        %1264 = vmatpush2.xpose.msra.mxu0 0.0
        %1265 = vmatprep.subr.mxu0 0.0
        %1266 = vmatpush2.xpose.msra.mxu0 0.0
        %1267 = vmatprep.subr.mxu0 0.0
        %1268 = vmatpush2.xpose.msra.mxu0 0.0
        %1269 = vmatprep.subr.mxu0 0.0
        %1270 = vmatpush2.xpose.msra.mxu0 0.0
        %1271 = vmatprep.subr.mxu0 0.0
        %1272 = vmatpush2.xpose.msra.mxu0 0.0
        %1273 = vmatprep.subr.mxu0 0.0
        %1274 = vmatpush2.xpose.msra.mxu0 0.0
        %1275 = vmatprep.subr.mxu0 0.0
        %1276 = vmatpush2.xpose.msra.mxu0 0.0
        %1277 = vmatprep.subr.mxu0 0.0
        %1278 = vmatpush2.xpose.msra.mxu0 0.0
        %1279 = vmatprep.subr.mxu0 0.0
        %1280 = vmatpush2.xpose.msra.mxu0 0.0
        %1281 = vmatprep.subr.mxu0 0.0
        %1282 = vmatpush2.xpose.msra.mxu0 0.0
        %1283 = vmatprep.mubr.f32.mxu0 0.0
        %1284 = vmatmul.mubr.f32.gmra.mxu0 %v1215
        %v1285 = vpop.f32.mrf.mxu0
        %v1286 = vadd.f32 0.0, %v1285
        %v1287 = vpop.f32.mrf.mxu0
        %1288 = vdwg.mxu0
        %s1289 = scalar_lea.vmem [#allocation3], 16
        %v1290 = vld [vmem:[%s1289] sm:$0xff]
        %v1291 = vsel %vm832, %v1286, -inf
        %1292 = vmax.xlane.f32.xlu0 %v1291
        %v1293 = vpop.xlane.xlu0 %1292
        %v1294 = vmax.f32 %v1290, %v1293
        %v1295 = vsub.f32 %v1290, %v1294
        %v1296 = vmul.f32 %v1295, 1.442695
        %v1297 = vpow.pop %v1296
        %1299 = vset.pattern.permute.xlu0 0
        %1300 = vperm.xlu0 %1299, %v1294
        %v1301 = vpop.permute.xlu0 %1300
        %v1303 = vsub.f32 %v1286, %v1301
        %v1304 = vmul.f32 %v1303, 1.442695
        %v1305 = vpow.pop %v1304
        %s1306 = scalar_lea.vmem [#allocation4], 16
        %v1307 = vld [vmem:[%s1306] sm:$0xff]
        %v1308 = vmul.f32 %v1297, %v1307
        %v1309 = vsel %vm832, %v1305, 0.0
        %1310 = vadd.xlane.f32.xlu0 %v1309
        %v1311 = vpop.xlane.xlu0 %1310
        %v1312 = vadd.f32 %v1308, %v1311
        %1313 = vst.msk [vmem:[%s1306] sm:$0xff] %vm931, %v1312
        %s1314 = scalar_lea.vmem [#allocation5], 16
        %v1315 = vld [vmem:[%s1314] sm:$0xff]
        %1317 = vset.pattern.permute.xlu0 0
        %1318 = vperm.xlu0 %1317, %v1297
        %v1319 = vpop.permute.xlu0 %1318
        %v1321 = vmul.f32 %v1319, %v1315
        %1322 = vrot.lane.b32.xlu0 %v828, 112
        %v1323 = vpop.permute.xlu0 %1322
        %v1326 = vsel %vm832, %v1305, 0
        %1328 = vmatprep.subr.mxu0 0.0
        %1329 = vmatpush1.msra.mxu0 0.0
        %1330 = vmatprep.subr.mxu0 0.0
        %1331 = vmatpush1.msra.mxu0 0.0
        %1332 = vmatprep.subr.mxu0 0.0
        %1333 = vmatpush1.msra.mxu0 0.0
        %1334 = vmatprep.subr.mxu0 0.0
        %1335 = vmatpush1.msra.mxu0 0.0
        %1336 = vmatprep.subr.mxu0 0.0
        %1337 = vmatpush1.msra.mxu0 0.0
        %1338 = vmatprep.subr.mxu0 0.0
        %1339 = vmatpush1.msra.mxu0 0.0
        %1340 = vmatprep.subr.mxu0 0.0
        %1341 = vmatpush1.msra.mxu0 0.0
        %1342 = vmatprep.subr.mxu0 0.0
        %1343 = vmatpush1.msra.mxu0 0.0
        %1344 = vmatprep.subr.mxu0 0.0
        %1345 = vmatpush1.msra.mxu0 0.0
        %1346 = vmatprep.subr.mxu0 0.0
        %1347 = vmatpush1.msra.mxu0 0.0
        %1348 = vmatprep.subr.mxu0 0.0
        %1349 = vmatpush1.msra.mxu0 0.0
        %1350 = vmatprep.subr.mxu0 0.0
        %1351 = vmatpush1.msra.mxu0 0.0
        %1352 = vmatprep.subr.mxu0 0.0
        %1353 = vmatpush1.msra.mxu0 0.0
        %1354 = vmatprep.subr.mxu0 0.0
        %1355 = vmatpush1.msra.mxu0 0.0
        %1356 = vmatprep.subr.mxu0 0.0
        %1357 = vmatpush1.msra.mxu0 0.0
        %1358 = vmatprep.subr.mxu0 0.0
        %1359 = vmatpush1.msra.mxu0 %v1323
        %1360 = vmatprep.subr.mxu0 0.0
        %1361 = vmatpush2.msra.mxu0 0.0
        %1362 = vmatprep.subr.mxu0 0.0
        %1363 = vmatpush2.msra.mxu0 0.0
        %1364 = vmatprep.subr.mxu0 0.0
        %1365 = vmatpush2.msra.mxu0 0.0
        %1366 = vmatprep.subr.mxu0 0.0
        %1367 = vmatpush2.msra.mxu0 0.0
        %1368 = vmatprep.subr.mxu0 0.0
        %1369 = vmatpush2.msra.mxu0 0.0
        %1370 = vmatprep.subr.mxu0 0.0
        %1371 = vmatpush2.msra.mxu0 0.0
        %1372 = vmatprep.subr.mxu0 0.0
        %1373 = vmatpush2.msra.mxu0 0.0
        %1374 = vmatprep.subr.mxu0 0.0
        %1375 = vmatpush2.msra.mxu0 0.0
        %1376 = vmatprep.subr.mxu0 0.0
        %1377 = vmatpush2.msra.mxu0 0.0
        %1378 = vmatprep.subr.mxu0 0.0
        %1379 = vmatpush2.msra.mxu0 0.0
        %1380 = vmatprep.subr.mxu0 0.0
        %1381 = vmatpush2.msra.mxu0 0.0
        %1382 = vmatprep.subr.mxu0 0.0
        %1383 = vmatpush2.msra.mxu0 0.0
        %1384 = vmatprep.subr.mxu0 0.0
        %1385 = vmatpush2.msra.mxu0 0.0
        %1386 = vmatprep.subr.mxu0 0.0
        %1387 = vmatpush2.msra.mxu0 0.0
        %1388 = vmatprep.subr.mxu0 0.0
        %1389 = vmatpush2.msra.mxu0 0.0
        %1390 = vmatprep.subr.mxu0 0.0
        %1391 = vmatpush2.msra.mxu0 0.0
        %1392 = vmatprep.mubr.f32.mxu0 0.0
        %1393 = vmatmul.mubr.f32.gmra.mxu0 %v1326
        %v1394 = vpop.f32.mrf.mxu0
        %v1395 = vadd.f32 0.0, %v1394
        %v1396 = vpop.f32.mrf.mxu0
        %1397 = vdwg.mxu0
        %v1398 = vadd.f32 %v1321, %v1395
        %1399 = vst.msk [vmem:[%s1314] sm:$0xff] %vm832, %v1398
        %1400 = vst.msk [vmem:[%s1289] sm:$0xff] %vm931, %v1294
        %v1401 = vld [vmem:[#allocation2] sm:$0xff]
        %1403 = vrot.lane.b32.xlu0 %v1401, 104
        %v1404 = vpop.permute.xlu0 %1403
        %1405 = vrot.lane.b32.xlu0 %v741, 104
        %v1406 = vpop.permute.xlu0 %1405
        %v1407 = vsel %vm832, %v1404, 0
        %v1409 = vsel %vm832, %v1406, 0
        %1411 = vmatprep.subr.mxu0 0.0
        %1412 = vmatpush1.xpose.msra.mxu0 0.0
        %1413 = vmatprep.subr.mxu0 0.0
        %1414 = vmatpush1.xpose.msra.mxu0 0.0
        %1415 = vmatprep.subr.mxu0 0.0
        %1416 = vmatpush1.xpose.msra.mxu0 0.0
        %1417 = vmatprep.subr.mxu0 0.0
        %1418 = vmatpush1.xpose.msra.mxu0 0.0
        %1419 = vmatprep.subr.mxu0 0.0
        %1420 = vmatpush1.xpose.msra.mxu0 0.0
        %1421 = vmatprep.subr.mxu0 0.0
        %1422 = vmatpush1.xpose.msra.mxu0 0.0
        %1423 = vmatprep.subr.mxu0 0.0
        %1424 = vmatpush1.xpose.msra.mxu0 0.0
        %1425 = vmatprep.subr.mxu0 0.0
        %1426 = vmatpush1.xpose.msra.mxu0 0.0
        %1427 = vmatprep.subr.mxu0 0.0
        %1428 = vmatpush1.xpose.msra.mxu0 0.0
        %1429 = vmatprep.subr.mxu0 0.0
        %1430 = vmatpush1.xpose.msra.mxu0 0.0
        %1431 = vmatprep.subr.mxu0 0.0
        %1432 = vmatpush1.xpose.msra.mxu0 0.0
        %1433 = vmatprep.subr.mxu0 0.0
        %1434 = vmatpush1.xpose.msra.mxu0 0.0
        %1435 = vmatprep.subr.mxu0 0.0
        %1436 = vmatpush1.xpose.msra.mxu0 0.0
        %1437 = vmatprep.subr.mxu0 0.0
        %1438 = vmatpush1.xpose.msra.mxu0 0.0
        %1439 = vmatprep.subr.mxu0 0.0
        %1440 = vmatpush1.xpose.msra.mxu0 0.0
        %1441 = vmatprep.subr.mxu0 0.0
        %1442 = vmatpush1.xpose.msra.mxu0 %v1409
        %1443 = vmatprep.subr.mxu0 0.0
        %1444 = vmatpush2.xpose.msra.mxu0 0.0
        %1445 = vmatprep.subr.mxu0 0.0
        %1446 = vmatpush2.xpose.msra.mxu0 0.0
        %1447 = vmatprep.subr.mxu0 0.0
        %1448 = vmatpush2.xpose.msra.mxu0 0.0
        %1449 = vmatprep.subr.mxu0 0.0
        %1450 = vmatpush2.xpose.msra.mxu0 0.0
        %1451 = vmatprep.subr.mxu0 0.0
        %1452 = vmatpush2.xpose.msra.mxu0 0.0
        %1453 = vmatprep.subr.mxu0 0.0
        %1454 = vmatpush2.xpose.msra.mxu0 0.0
        %1455 = vmatprep.subr.mxu0 0.0
        %1456 = vmatpush2.xpose.msra.mxu0 0.0
        %1457 = vmatprep.subr.mxu0 0.0
        %1458 = vmatpush2.xpose.msra.mxu0 0.0
        %1459 = vmatprep.subr.mxu0 0.0
        %1460 = vmatpush2.xpose.msra.mxu0 0.0
        %1461 = vmatprep.subr.mxu0 0.0
        %1462 = vmatpush2.xpose.msra.mxu0 0.0
        %1463 = vmatprep.subr.mxu0 0.0
        %1464 = vmatpush2.xpose.msra.mxu0 0.0
        %1465 = vmatprep.subr.mxu0 0.0
        %1466 = vmatpush2.xpose.msra.mxu0 0.0
        %1467 = vmatprep.subr.mxu0 0.0
        %1468 = vmatpush2.xpose.msra.mxu0 0.0
        %1469 = vmatprep.subr.mxu0 0.0
        %1470 = vmatpush2.xpose.msra.mxu0 0.0
        %1471 = vmatprep.subr.mxu0 0.0
        %1472 = vmatpush2.xpose.msra.mxu0 0.0
        %1473 = vmatprep.subr.mxu0 0.0
        %1474 = vmatpush2.xpose.msra.mxu0 0.0
        %1475 = vmatprep.mubr.f32.mxu0 0.0
        %1476 = vmatmul.mubr.f32.gmra.mxu0 %v1407
        %v1477 = vpop.f32.mrf.mxu0
        %v1478 = vadd.f32 0.0, %v1477
        %v1479 = vpop.f32.mrf.mxu0
        %1480 = vdwg.mxu0
        %s1481 = scalar_lea.vmem [#allocation3], 24
        %v1482 = vld [vmem:[%s1481] sm:$0xff]
        %v1483 = vsel %vm832, %v1478, -inf
        %1484 = vmax.xlane.f32.xlu0 %v1483
        %v1485 = vpop.xlane.xlu0 %1484
        %v1486 = vmax.f32 %v1482, %v1485
        %v1487 = vsub.f32 %v1482, %v1486
        %v1488 = vmul.f32 %v1487, 1.442695
        %v1489 = vpow.pop %v1488
        %1491 = vset.pattern.permute.xlu0 0
        %1492 = vperm.xlu0 %1491, %v1486
        %v1493 = vpop.permute.xlu0 %1492
        %v1495 = vsub.f32 %v1478, %v1493
        %v1496 = vmul.f32 %v1495, 1.442695
        %v1497 = vpow.pop %v1496
        %s1498 = scalar_lea.vmem [#allocation4], 24
        %v1499 = vld [vmem:[%s1498] sm:$0xff]
        %v1500 = vmul.f32 %v1489, %v1499
        %v1501 = vsel %vm832, %v1497, 0.0
        %1502 = vadd.xlane.f32.xlu0 %v1501
        %v1503 = vpop.xlane.xlu0 %1502
        %v1504 = vadd.f32 %v1500, %v1503
        %1505 = vst.msk [vmem:[%s1498] sm:$0xff] %vm931, %v1504
        %s1506 = scalar_lea.vmem [#allocation5], 24
        %v1507 = vld [vmem:[%s1506] sm:$0xff]
        %1509 = vset.pattern.permute.xlu0 0
        %1510 = vperm.xlu0 %1509, %v1489
        %v1511 = vpop.permute.xlu0 %1510
        %v1513 = vmul.f32 %v1511, %v1507
        %1514 = vrot.lane.b32.xlu0 %v828, 104
        %v1515 = vpop.permute.xlu0 %1514
        %v1518 = vsel %vm832, %v1497, 0
        %1520 = vmatprep.subr.mxu0 0.0
        %1521 = vmatpush1.msra.mxu0 0.0
        %1522 = vmatprep.subr.mxu0 0.0
        %1523 = vmatpush1.msra.mxu0 0.0
        %1524 = vmatprep.subr.mxu0 0.0
        %1525 = vmatpush1.msra.mxu0 0.0
        %1526 = vmatprep.subr.mxu0 0.0
        %1527 = vmatpush1.msra.mxu0 0.0
        %1528 = vmatprep.subr.mxu0 0.0
        %1529 = vmatpush1.msra.mxu0 0.0
        %1530 = vmatprep.subr.mxu0 0.0
        %1531 = vmatpush1.msra.mxu0 0.0
        %1532 = vmatprep.subr.mxu0 0.0
        %1533 = vmatpush1.msra.mxu0 0.0
        %1534 = vmatprep.subr.mxu0 0.0
        %1535 = vmatpush1.msra.mxu0 0.0
        %1536 = vmatprep.subr.mxu0 0.0
        %1537 = vmatpush1.msra.mxu0 0.0
        %1538 = vmatprep.subr.mxu0 0.0
        %1539 = vmatpush1.msra.mxu0 0.0
        %1540 = vmatprep.subr.mxu0 0.0
        %1541 = vmatpush1.msra.mxu0 0.0
        %1542 = vmatprep.subr.mxu0 0.0
        %1543 = vmatpush1.msra.mxu0 0.0
        %1544 = vmatprep.subr.mxu0 0.0
        %1545 = vmatpush1.msra.mxu0 0.0
        %1546 = vmatprep.subr.mxu0 0.0
        %1547 = vmatpush1.msra.mxu0 0.0
        %1548 = vmatprep.subr.mxu0 0.0
        %1549 = vmatpush1.msra.mxu0 0.0
        %1550 = vmatprep.subr.mxu0 0.0
        %1551 = vmatpush1.msra.mxu0 %v1515
        %1552 = vmatprep.subr.mxu0 0.0
        %1553 = vmatpush2.msra.mxu0 0.0
        %1554 = vmatprep.subr.mxu0 0.0
        %1555 = vmatpush2.msra.mxu0 0.0
        %1556 = vmatprep.subr.mxu0 0.0
        %1557 = vmatpush2.msra.mxu0 0.0
        %1558 = vmatprep.subr.mxu0 0.0
        %1559 = vmatpush2.msra.mxu0 0.0
        %1560 = vmatprep.subr.mxu0 0.0
        %1561 = vmatpush2.msra.mxu0 0.0
        %1562 = vmatprep.subr.mxu0 0.0
        %1563 = vmatpush2.msra.mxu0 0.0
        %1564 = vmatprep.subr.mxu0 0.0
        %1565 = vmatpush2.msra.mxu0 0.0
        %1566 = vmatprep.subr.mxu0 0.0
        %1567 = vmatpush2.msra.mxu0 0.0
        %1568 = vmatprep.subr.mxu0 0.0
        %1569 = vmatpush2.msra.mxu0 0.0
        %1570 = vmatprep.subr.mxu0 0.0
        %1571 = vmatpush2.msra.mxu0 0.0
        %1572 = vmatprep.subr.mxu0 0.0
        %1573 = vmatpush2.msra.mxu0 0.0
        %1574 = vmatprep.subr.mxu0 0.0
        %1575 = vmatpush2.msra.mxu0 0.0
        %1576 = vmatprep.subr.mxu0 0.0
        %1577 = vmatpush2.msra.mxu0 0.0
        %1578 = vmatprep.subr.mxu0 0.0
        %1579 = vmatpush2.msra.mxu0 0.0
        %1580 = vmatprep.subr.mxu0 0.0
        %1581 = vmatpush2.msra.mxu0 0.0
        %1582 = vmatprep.subr.mxu0 0.0
        %1583 = vmatpush2.msra.mxu0 0.0
        %1584 = vmatprep.mubr.f32.mxu0 0.0
        %1585 = vmatmul.mubr.f32.gmra.mxu0 %v1518
        %v1586 = vpop.f32.mrf.mxu0
        %v1587 = vadd.f32 0.0, %v1586
        %v1588 = vpop.f32.mrf.mxu0
        %1589 = vdwg.mxu0
        %v1590 = vadd.f32 %v1513, %v1587
        %1591 = vst.msk [vmem:[%s1506] sm:$0xff] %vm832, %v1590
        %1592 = vst.msk [vmem:[%s1481] sm:$0xff] %vm931, %v1486
        // Predicated region
        $region93: #{attention_layer_forward.2} parent=55 // pred_check
          %p1593 = pneg %p547
        $region94: #{attention_layer_forward.2} parent=55 // pred_check_branch
          %1595 = sbr.rel (%p1593) target = $region96
        $region95: #{attention_layer_forward.2} parent=55 // pred_region
          %v1596 = vld [vmem:[#allocation5] sm:$0xff]
          %v1597 = vld [vmem:[#allocation5 + $0x8] sm:$0xff]
          %v1598 = vld [vmem:[#allocation5 + $0x10] sm:$0xff]
          %v1599 = vld [vmem:[#allocation5 + $0x18] sm:$0xff]
          %v1600 = vld [vmem:[#allocation4] sm:$0xff]
          %v1601 = vld [vmem:[#allocation4 + $0x8] sm:$0xff]
          %v1602 = vld [vmem:[#allocation4 + $0x10] sm:$0xff]
          %v1603 = vld [vmem:[#allocation4 + $0x18] sm:$0xff]
          %1605 = vset.pattern.permute.xlu0 0
          %1606 = vperm.xlu0 %1605, %v1600
          %v1607 = vpop.permute.xlu0 %1606
          %1610 = vset.pattern.permute.xlu0 0
          %1611 = vperm.xlu0 %1610, %v1601
          %v1612 = vpop.permute.xlu0 %1611
          %1615 = vset.pattern.permute.xlu0 0
          %1616 = vperm.xlu0 %1615, %v1602
          %v1617 = vpop.permute.xlu0 %1616
          %1620 = vset.pattern.permute.xlu0 0
          %1621 = vperm.xlu0 %1620, %v1603
          %v1622 = vpop.permute.xlu0 %1621
          %v1624 = vrcp.pop %v1607
          %v1625 = vmul.f32 %v1596, %v1624
          %v1626 = vrcp.pop %v1612
          %v1627 = vmul.f32 %v1597, %v1626
          %v1628 = vrcp.pop %v1617
          %v1629 = vmul.f32 %v1598, %v1628
          %v1630 = vrcp.pop %v1622
          %v1631 = vmul.f32 %v1599, %v1630
          %1632 = vst.msk [vmem:[%s545] sm:$0xff] %vm832, %v1625
          %1633 = vst.msk [vmem:[%s545 + $0x8] sm:$0xff] %vm832, %v1627
          %1634 = vst.msk [vmem:[%s545 + $0x10] sm:$0xff] %vm832, %v1629
          %1635 = vst.msk [vmem:[%s545 + $0x18] sm:$0xff] %vm832, %v1631
        $region96: #{attention_layer_forward.2} parent=55 // pred_fallthru
          _
        %s1636 = smul.u32 4, %s37
        %p1637 = scmp.lt.s32.totalorder %s35, 1
        %s1638 = scalar_select %p1637, %s35, 1
        %p1639 = scmp.lt.s32.totalorder %s1636, 3
        %s1640 = scalar_select %p1639, %s1636, 3
        %p1641 = scmp.lt.s32.totalorder %s36, 0
        %s1642 = scalar_select %p1641, %s36, 0
        %s1643 = sadd.s32 %s1642, %s1640
        %s1644 = smul.addr %s1638, 4
        %s1645 = sadd.s32 %s1643, %s1644
        %s1646 = smul.addr %s1645, 8
        %s1647 = scalar_lea.vmem %s9, %s1646
        // Predicated region
        $region97: #{attention_layer_forward.2} parent=55 // pred_check
          %p1648 = pneg %p287
        $region98: #{attention_layer_forward.2} parent=55 // pred_check_branch
          %1650 = sbr.rel (%p1648) target = $region100
        $region99: #{attention_layer_forward.2} parent=55 // pred_region
          %s1651 = smul.u32 4, %s37
        $region100: #{attention_layer_forward.2} parent=55 // pred_fallthru
          _
      $region56: #{attention_layer_forward.2} parent=5 // pred_fallthru
        _
      %p1652 = scmp.le.s32.totalorder 2, %s24
      // Predicated region
      $region101: #{attention_layer_forward.2} parent=5 // pred_check
        %p1653 = pneg %p1652
      $region102: #{attention_layer_forward.2} parent=5 // pred_check_branch
        %1655 = sbr.rel (%p1653) target = $region104
      $region103: #{attention_layer_forward.2} parent=5 // pred_region
        %s1656 = ssub.s32 %s24, 2
        // Predicated region
        $region105: #{attention_layer_forward.2} parent=103 // pred_check
          %p1657 = pneg %p293
        $region106: #{attention_layer_forward.2} parent=103 // pred_check_branch
          %1659 = sbr.rel (%p1657) target = $region108
        $region107: #{attention_layer_forward.2} parent=103 // pred_region
          %s1660 = smul.u32 4, %s41
          %p1661 = scmp.lt.s32.totalorder %s39, 1
          %s1662 = scalar_select %p1661, %s39, 1
          %p1663 = scmp.lt.s32.totalorder %s1660, 3
          %s1664 = scalar_select %p1663, %s1660, 3
          %p1665 = scmp.lt.s32.totalorder %s40, 0
          %s1666 = scalar_select %p1665, %s40, 0
          %s1667 = sadd.s32 %s1666, %s1664
          %s1668 = smul.addr %s1662, 4
          %s1669 = sadd.s32 %s1667, %s1668
          %s1670 = smul.addr %s1669, 8
          %s1671 = scalar_lea.vmem %s9, %s1670
        $region108: #{attention_layer_forward.2} parent=103 // pred_fallthru
          _
      $region104: #{attention_layer_forward.2} parent=5 // pred_fallthru
        _
    $region6: #{attention_layer_forward.2} parent=1 // loop_footer
      %s28 = sadd.s32 1, %s24
    $region7: #{attention_layer_forward.2} parent=1 // loop_footer_branch
      %23 = sbr.rel target = $region3
    $region8: #{attention_layer_forward.2} parent=1 // loop_exit
      _
    %1672 = vsyncpa [#allocation7], 1
    %s1673 = scalar_lea.sflag [#allocation7], 1
    %1674 = vsyncpa %s1673, 1
    %1675 = vsyncpa [#allocation9], 1
    %s1676 = scalar_lea.sflag [#allocation9], 1
    %1677 = vsyncpa %s1676, 1
    %1678 = vsyncpa [#allocation12], 1
    %1679 = vsyncpa [#allocation15], 1
    %1680 = vsyncpa [#allocation18], 1

</llo_original>
